<compile_context>
chip_gen: v5e
topology: v5e:2x2
jax: 0.10.0
libtpu: 0.0.40
codegen_flags: <defaults>
</compile_context>

<pallas_src>
import functools

import jax
import jax.numpy as jnp
from jax.experimental import pallas as pl
from jax.experimental.pallas import tpu as pltpu


B, H, W = 2, 16, 16
HW = H * W
IMG_C = 3          # RGB
CONT_C = 8         # content-code channels
STYLE_C = 8        # class/style-code dims
DIS_F = 8          # discriminator feature channels
NUM_CLASSES = 4
SZ_EMBED = 8
PACK_COLS = 128    # packed weights/labels slab is exactly one (8, 128) f32 tile


def _conv1x1(w, b, x, act="none"):
    """1x1 conv in (C, M) layout as unrolled rank-1 VPU updates.

    w: (Cout, Cin), b: (Cout, 1) or None, x: (Cin, M) -> (Cout, M).
    Cin is tiny (3-8), so VPU broadcast-FMAs beat an under-filled MXU matmul.
    TODO(synk): at real FUNIT channel counts (64-256, 3x3), switch to bf16 MXU
    matmuls (256-multiple tiles on v6e/v7x, 128 on v5e) with f32 accumulation.
    """
    _, cin = w.shape
    y = w[:, 0:1] * x[0:1, :]
    for ci in range(1, cin):
        y = y + w[:, ci:ci + 1] * x[ci:ci + 1, :]
    if b is not None:
        y = y + b
    if act == "relu":
        y = jnp.maximum(y, 0.0)
    elif act == "lrelu":
        y = jnp.maximum(y, 0.2 * y)      # 2 VALU ops (mul+max) vs 3 for where()
    elif act == "tanh":
        y = jnp.tanh(y)                  # EUP
    return y


def _lane_expand(cols, hw):
    """(R, n) -> (R, n*hw): broadcast each column over hw lanes (wide concat)."""
    rows, n = cols.shape
    return jnp.concatenate(
        [jnp.broadcast_to(cols[:, j:j + 1], (rows, hw)) for j in range(n)], axis=1)


def _fused_gen_update_kernel(img_ref, wp_ref, out_ref, *, batch, hw, off,
                             gan_w, r_w, fm_w):
    x = img_ref[...]          # (IMG_C, 2*batch*hw): [xa_b0|xa_b1|xb_b0|xb_b1]
    wp = wp_ref[...]          # (8, 128) packed weights + one-hot labels

    m = batch * hw            # lanes per image pair
    xa = x[:, 0:m]

    def w_at(name, rows, cols):
        c0 = off[name]
        return wp[0:rows, c0:c0 + cols]

    wc, bc = w_at("wc", CONT_C, IMG_C), w_at("bc", CONT_C, 1)
    wk, bk = w_at("wk", STYLE_C, IMG_C), w_at("bk", STYLE_C, 1)
    wg, bg = w_at("wg", CONT_C, STYLE_C), w_at("bg", CONT_C, 1)
    wbt, bbt = w_at("wbt", CONT_C, STYLE_C), w_at("bbt", CONT_C, 1)
    wo, bo = w_at("wo", IMG_C, CONT_C), w_at("bo", IMG_C, 1)
    wdf, bdf = w_at("wdf", DIS_F, IMG_C), w_at("bdf", DIS_F, 1)
    wdlt = w_at("wdlt", DIS_F, NUM_CLASSES)        # W_logit^T
    bdl_row = w_at("bdlr", 1, NUM_CLASSES)         # b_logit as a row
    oh_all = w_at("oha", NUM_CLASSES, 2 * batch)   # [onehot(la) | onehot(lb)]

    # --- generator encoders: each conv once, on the widest lane-dense slab ---
    c_xa = _conv1x1(wc, bc, xa, "relu")            # (CONT_C, m)
    hk = _conv1x1(wk, bk, x, "relu")               # (STYLE_C, 2m)
    # pooled class codes per image (hk dies here), re-expanded to full lanes;
    # segment order: [s_xa_b0 | s_xa_b1 | s_xb_b0 | s_xb_b1]
    s_full = jnp.concatenate(
        [jnp.broadcast_to(
            jnp.mean(hk[:, j * hw:(j + 1) * hw], axis=1, keepdims=True),
            (STYLE_C, hw)) for j in range(2 * batch)], axis=1)   # (STYLE_C, 2m)

    # --- AdaIN decode of xr (own style) and xt (style of xb) in one pass -----
    gamma = _conv1x1(wg, bg, s_full)               # (CONT_C, 2m)
    beta = _conv1x1(wbt, bbt, s_full)
    content_rt = jnp.concatenate([c_xa, c_xa], axis=1)      # xr|xt share content
    h_rt = jnp.maximum(content_rt * (1.0 + gamma) + beta, 0.0)
    xrt = _conv1x1(wo, bo, h_rt, "tanh")           # (IMG_C, 2m) = [xr | xt]

    # --- discriminator features: ONE conv over [xa | xb | xr | xt] -----------
    feat = _conv1x1(wdf, bdf, jnp.concatenate([x, xrt], axis=1), "lrelu")
    feat_a, feat_b = feat[:, 0:m], feat[:, m:2 * m]          # real-image feats
    feat_rt = feat[:, 2 * m:4 * m]                           # fake-image feats
    feat_r, feat_t = feat_rt[:, 0:m], feat_rt[:, m:2 * m]

    # --- class-selected logit row (replaces K-class conv + one-hot mask) -----
    wsel = _lane_expand(_conv1x1(wdlt, None, oh_all), hw)    # (DIS_F, 2m)
    bsel = _lane_expand(_conv1x1(bdl_row, None, oh_all), hw)  # (1, 2m)
    sel = wsel[0:1, :] * feat_rt[0:1, :]
    for ci in range(1, DIS_F):
        sel = sel + wsel[ci:ci + 1, :] * feat_rt[ci:ci + 1, :]
    sel = sel + bsel                                          # (1, 2m): [resp_r | resp_t]

    # --- losses: 5 cross-lane reductions total --------------------------------
    n_pix = float(m)
    l_adv = -0.5 * jnp.sum(sel) / n_pix                       # 0.5*(l_adv_r + l_adv_t)
    acc = 0.5 * jnp.sum((sel >= 0.0).astype(jnp.float32)) / n_pix
    l_x_rec = jnp.sum(jnp.abs(xrt[:, 0:m] - xa)) / (n_pix * IMG_C)
    l_c_rec = jnp.sum(jnp.abs(feat_r - feat_a)) / (n_pix * DIS_F)
    l_m_rec = jnp.sum(jnp.abs(feat_t - 0.5 * (feat_a + feat_b))) / (n_pix * DIS_F)
    l_total = gan_w * l_adv + r_w * l_x_rec + fm_w * (l_c_rec + l_m_rec)

    out_ref[0, 0] = l_total
    out_ref[0, 1] = l_adv
    out_ref[0, 2] = l_x_rec
    out_ref[0, 3] = l_c_rec
    out_ref[0, 4] = l_m_rec
    out_ref[0, 5] = acc


# --------------------------- params / wrapper glue ---------------------------

def init_params(key):
    ks = jax.random.split(key, 8)

    def wmat(k, shape, scale=0.3):
        return jax.random.normal(k, shape, jnp.float32) * scale

    def bias(cout):
        return jnp.zeros((cout, 1), jnp.float32)

    return {
        # FewShotGen (weights stored (Cout, Cin); biases (Cout, 1))
        "w_content": wmat(ks[0], (CONT_C, IMG_C)), "b_content": bias(CONT_C),
        "w_class":   wmat(ks[1], (STYLE_C, IMG_C)), "b_class": bias(STYLE_C),
        "w_gamma":   wmat(ks[2], (CONT_C, STYLE_C)), "b_gamma": bias(CONT_C),
        "w_beta":    wmat(ks[3], (CONT_C, STYLE_C)), "b_beta": bias(CONT_C),
        "w_out":     wmat(ks[4], (IMG_C, CONT_C)),  "b_out": bias(IMG_C),
        # GPPatchMcResDis
        "w_dfeat":   wmat(ks[5], (DIS_F, IMG_C)),   "b_dfeat": bias(DIS_F),
        "w_dlogit":  wmat(ks[6], (NUM_CLASSES, DIS_F)), "b_dlogit": bias(NUM_CLASSES),
        # proxies = randn(num_classes, sz_embed) / 8 (unused on gen_update path)
        "proxies": jax.random.normal(ks[7], (NUM_CLASSES, SZ_EMBED), jnp.float32) / 8.0,
    }


def _nchw_to_cm(x):
    # (B, C, H, W) -> (C, B*H*W): channels on sublanes, pixels on lanes.
    b, c, h, w = x.shape
    return jnp.transpose(x, (1, 0, 2, 3)).reshape(c, b * h * w).astype(jnp.float32)


def _pack_params(params, la, lb):
    """Pack all weights/biases + one-hot labels into ONE (8, 128) f32 tile."""
    oha = jax.nn.one_hot(la, NUM_CLASSES, dtype=jnp.float32).T    # (K, B)
    ohb = jax.nn.one_hot(lb, NUM_CLASSES, dtype=jnp.float32).T
    entries = [
        ("wc", params["w_content"]), ("bc", params["b_content"]),
        ("wk", params["w_class"]),   ("bk", params["b_class"]),
        ("wg", params["w_gamma"]),   ("bg", params["b_gamma"]),
        ("wbt", params["w_beta"]),   ("bbt", params["b_beta"]),
        ("wo", params["w_out"]),     ("bo", params["b_out"]),
        ("wdf", params["w_dfeat"]),  ("bdf", params["b_dfeat"]),
        ("wdlt", params["w_dlogit"].T), ("bdlr", params["b_dlogit"].T),
        ("oha", oha), ("ohb", ohb),     # oha/ohb must stay adjacent (read jointly)
    ]
    wp = jnp.zeros((8, PACK_COLS), jnp.float32)
    off, c = {}, 0
    for name, arr in entries:
        r, k = arr.shape
        off[name] = c
        wp = wp.at[0:r, c:c + k].set(arr.astype(jnp.float32))
        c += k
    assert c <= PACK_COLS
    return wp, off


def funit_forward_gen_update(params, xa, la, xb, lb, hp):
    """FUNITModel.forward(..., mode='gen_update') losses, in one fused kernel."""
    batch = xa.shape[0]
    hw = xa.shape[2] * xa.shape[3]

    imgs = jnp.concatenate([_nchw_to_cm(xa), _nchw_to_cm(xb)], axis=1)  # (3, 2*B*HW)
    wp, off = _pack_params(params, la, lb)

    kernel = functools.partial(
        _fused_gen_update_kernel, batch=batch, hw=hw, off=off,
        gan_w=float(hp["gan_w"]), r_w=float(hp["r_w"]), fm_w=float(hp["fm_w"]))

    vmem = pl.BlockSpec(memory_space=pltpu.MemorySpace.VMEM)
    smem = pl.BlockSpec(memory_space=pltpu.MemorySpace.SMEM)

    out = pl.pallas_call(
        kernel,
        out_shape=jax.ShapeDtypeStruct((1, 6), jnp.float32),
        in_specs=[vmem, vmem],        # 2 DMAs total: image slab + packed weights
        out_specs=smem,               # 1 writeback: all six scalars
        # No grid: the whole working set (< 100 KiB) lives in VMEM for one
        # invocation.  TODO(synk): at real FUNIT sizes add a pixel grid axis
        # marked "parallel" (v7x dual TensorCores) and re-budget tiles against
        # v7x's 64 MiB VMEM (vs 128 MiB on v5e/v6e).
    )(imgs, wp)

    l_total, l_adv, l_x_rec, l_c_rec, l_m_rec, acc = [out[0, i] for i in range(6)]
    # TODO(synk): l_total.backward() (autograd step) has no Pallas equivalent.
    return l_total, l_adv, l_x_rec, l_c_rec, l_m_rec, acc


# ----------------------------------- main -----------------------------------

if __name__ == "__main__":
    key = jax.random.PRNGKey(0)
    kp, kxa, kxb, kla, klb = jax.random.split(key, 5)

    params = init_params(kp)
    xa = jax.random.normal(kxa, (B, IMG_C, H, W), jnp.float32)   # NCHW like torch
    xb = jax.random.normal(kxb, (B, IMG_C, H, W), jnp.float32)
    la = jax.random.randint(kla, (B,), 0, NUM_CLASSES)
    lb = jax.random.randint(klb, (B,), 0, NUM_CLASSES)
    hp = {"gan_w": 1.0, "r_w": 0.1, "fm_w": 1.0}

    outs = funit_forward_gen_update(params, xa, la, xb, lb, hp)
    outs = jax.block_until_ready(outs)
    l_total = float(outs[0])
    assert jnp.isfinite(l_total)
    print("KERNEL_OK")
</pallas_src>

<mosaic_0001>
module attributes {stable_mosaic.version = 11 : i64} {
  func.func @_fused_gen_update_kernel(%arg0: memref<3x1024xf32, #tpu.memory_space<vmem>>, %arg1: memref<8x128xf32, #tpu.memory_space<vmem>>, %arg2: memref<1x6xf32, #tpu.memory_space<smem>>) attributes {dimension_semantics = [], scalar_prefetch = 0 : i64, scratch_operands = 0 : i64, tpu.core_type = #tpu.core_type<tc>} {
    %c0 = arith.constant 0 : index
    %c0_0 = arith.constant 0 : index
    %0 = vector.load %arg0[%c0, %c0_0] : memref<3x1024xf32, #tpu.memory_space<vmem>>, vector<3x1024xf32>
    %c0_1 = arith.constant 0 : index
    %c0_2 = arith.constant 0 : index
    %1 = vector.load %arg1[%c0_1, %c0_2] : memref<8x128xf32, #tpu.memory_space<vmem>>, vector<8x128xf32>
    %2 = vector.extract_strided_slice %0 {offsets = [0, 0], sizes = [3, 512], strides = [1, 1]} : vector<3x1024xf32> to vector<3x512xf32>
    %3 = vector.extract_strided_slice %1 {offsets = [0, 0], sizes = [8, 3], strides = [1, 1]} : vector<8x128xf32> to vector<8x3xf32>
    %4 = vector.extract_strided_slice %1 {offsets = [0, 3], sizes = [8, 1], strides = [1, 1]} : vector<8x128xf32> to vector<8x1xf32>
    %5 = vector.extract_strided_slice %1 {offsets = [0, 4], sizes = [8, 3], strides = [1, 1]} : vector<8x128xf32> to vector<8x3xf32>
    %6 = vector.extract_strided_slice %1 {offsets = [0, 7], sizes = [8, 1], strides = [1, 1]} : vector<8x128xf32> to vector<8x1xf32>
    %7 = vector.extract_strided_slice %1 {offsets = [0, 8], sizes = [8, 8], strides = [1, 1]} : vector<8x128xf32> to vector<8x8xf32>
    %8 = vector.extract_strided_slice %1 {offsets = [0, 16], sizes = [8, 1], strides = [1, 1]} : vector<8x128xf32> to vector<8x1xf32>
    %9 = vector.extract_strided_slice %1 {offsets = [0, 17], sizes = [8, 8], strides = [1, 1]} : vector<8x128xf32> to vector<8x8xf32>
    %10 = vector.extract_strided_slice %1 {offsets = [0, 25], sizes = [8, 1], strides = [1, 1]} : vector<8x128xf32> to vector<8x1xf32>
    %11 = vector.extract_strided_slice %1 {offsets = [0, 26], sizes = [3, 8], strides = [1, 1]} : vector<8x128xf32> to vector<3x8xf32>
    %12 = vector.extract_strided_slice %1 {offsets = [0, 34], sizes = [3, 1], strides = [1, 1]} : vector<8x128xf32> to vector<3x1xf32>
    %13 = vector.extract_strided_slice %1 {offsets = [0, 35], sizes = [8, 3], strides = [1, 1]} : vector<8x128xf32> to vector<8x3xf32>
    %14 = vector.extract_strided_slice %1 {offsets = [0, 38], sizes = [8, 1], strides = [1, 1]} : vector<8x128xf32> to vector<8x1xf32>
    %15 = vector.extract_strided_slice %1 {offsets = [0, 39], sizes = [8, 4], strides = [1, 1]} : vector<8x128xf32> to vector<8x4xf32>
    %16 = vector.extract_strided_slice %1 {offsets = [0, 43], sizes = [1, 4], strides = [1, 1]} : vector<8x128xf32> to vector<1x4xf32>
    %17 = vector.extract_strided_slice %1 {offsets = [0, 47], sizes = [4, 4], strides = [1, 1]} : vector<8x128xf32> to vector<4x4xf32>
    %18 = vector.extract_strided_slice %3 {offsets = [0, 0], sizes = [8, 1], strides = [1, 1]} : vector<8x3xf32> to vector<8x1xf32>
    %19 = vector.extract_strided_slice %2 {offsets = [0, 0], sizes = [1, 512], strides = [1, 1]} : vector<3x512xf32> to vector<1x512xf32>
    %20 = vector.broadcast %18 : vector<8x1xf32> to vector<8x512xf32>
    %21 = vector.broadcast %19 : vector<1x512xf32> to vector<8x512xf32>
    %22 = arith.mulf %20, %21 : vector<8x512xf32>
    %23 = vector.extract_strided_slice %3 {offsets = [0, 1], sizes = [8, 1], strides = [1, 1]} : vector<8x3xf32> to vector<8x1xf32>
    %24 = vector.extract_strided_slice %2 {offsets = [1, 0], sizes = [1, 512], strides = [1, 1]} : vector<3x512xf32> to vector<1x512xf32>
    %25 = vector.broadcast %23 : vector<8x1xf32> to vector<8x512xf32>
    %26 = vector.broadcast %24 : vector<1x512xf32> to vector<8x512xf32>
    %27 = arith.mulf %25, %26 : vector<8x512xf32>
    %28 = arith.addf %22, %27 : vector<8x512xf32>
    %29 = vector.extract_strided_slice %3 {offsets = [0, 2], sizes = [8, 1], strides = [1, 1]} : vector<8x3xf32> to vector<8x1xf32>
    %30 = vector.extract_strided_slice %2 {offsets = [2, 0], sizes = [1, 512], strides = [1, 1]} : vector<3x512xf32> to vector<1x512xf32>
    %31 = vector.broadcast %29 : vector<8x1xf32> to vector<8x512xf32>
    %32 = vector.broadcast %30 : vector<1x512xf32> to vector<8x512xf32>
    %33 = arith.mulf %31, %32 : vector<8x512xf32>
    %34 = arith.addf %28, %33 : vector<8x512xf32>
    %35 = vector.broadcast %4 : vector<8x1xf32> to vector<8x512xf32>
    %36 = arith.addf %34, %35 : vector<8x512xf32>
    %cst = arith.constant 0.000000e+00 : f32
    %37 = vector.broadcast %cst : f32 to vector<8x512xf32>
    %38 = arith.maximumf %36, %37 : vector<8x512xf32>
    %39 = vector.extract_strided_slice %5 {offsets = [0, 0], sizes = [8, 1], strides = [1, 1]} : vector<8x3xf32> to vector<8x1xf32>
    %40 = vector.extract_strided_slice %0 {offsets = [0, 0], sizes = [1, 1024], strides = [1, 1]} : vector<3x1024xf32> to vector<1x1024xf32>
    %41 = vector.broadcast %39 : vector<8x1xf32> to vector<8x1024xf32>
    %42 = vector.broadcast %40 : vector<1x1024xf32> to vector<8x1024xf32>
    %43 = arith.mulf %41, %42 : vector<8x1024xf32>
    %44 = vector.extract_strided_slice %5 {offsets = [0, 1], sizes = [8, 1], strides = [1, 1]} : vector<8x3xf32> to vector<8x1xf32>
    %45 = vector.extract_strided_slice %0 {offsets = [1, 0], sizes = [1, 1024], strides = [1, 1]} : vector<3x1024xf32> to vector<1x1024xf32>
    %46 = vector.broadcast %44 : vector<8x1xf32> to vector<8x1024xf32>
    %47 = vector.broadcast %45 : vector<1x1024xf32> to vector<8x1024xf32>
    %48 = arith.mulf %46, %47 : vector<8x1024xf32>
    %49 = arith.addf %43, %48 : vector<8x1024xf32>
    %50 = vector.extract_strided_slice %5 {offsets = [0, 2], sizes = [8, 1], strides = [1, 1]} : vector<8x3xf32> to vector<8x1xf32>
    %51 = vector.extract_strided_slice %0 {offsets = [2, 0], sizes = [1, 1024], strides = [1, 1]} : vector<3x1024xf32> to vector<1x1024xf32>
    %52 = vector.broadcast %50 : vector<8x1xf32> to vector<8x1024xf32>
    %53 = vector.broadcast %51 : vector<1x1024xf32> to vector<8x1024xf32>
    %54 = arith.mulf %52, %53 : vector<8x1024xf32>
    %55 = arith.addf %49, %54 : vector<8x1024xf32>
    %56 = vector.broadcast %6 : vector<8x1xf32> to vector<8x1024xf32>
    %57 = arith.addf %55, %56 : vector<8x1024xf32>
    %cst_3 = arith.constant 0.000000e+00 : f32
    %58 = vector.broadcast %cst_3 : f32 to vector<8x1024xf32>
    %59 = arith.maximumf %57, %58 : vector<8x1024xf32>
    %60 = vector.extract_strided_slice %59 {offsets = [0, 0], sizes = [8, 256], strides = [1, 1]} : vector<8x1024xf32> to vector<8x256xf32>
    %cst_4 = arith.constant dense<0.000000e+00> : vector<8xf32>
    %61 = vector.multi_reduction <add>, %60, %cst_4 [1] : vector<8x256xf32> to vector<8xf32>
    %62 = vector.shape_cast %61 : vector<8xf32> to vector<8x1xf32>
    %cst_5 = arith.constant 2.560000e+02 : f32
    %63 = vector.broadcast %cst_5 : f32 to vector<8x1xf32>
    %64 = arith.divf %62, %63 : vector<8x1xf32>
    %65 = vector.shape_cast %64 : vector<8x1xf32> to vector<8x1xf32>
    %66 = vector.broadcast %65 : vector<8x1xf32> to vector<8x256xf32>
    %67 = vector.extract_strided_slice %59 {offsets = [0, 256], sizes = [8, 256], strides = [1, 1]} : vector<8x1024xf32> to vector<8x256xf32>
    %cst_6 = arith.constant dense<0.000000e+00> : vector<8xf32>
    %68 = vector.multi_reduction <add>, %67, %cst_6 [1] : vector<8x256xf32> to vector<8xf32>
    %69 = vector.shape_cast %68 : vector<8xf32> to vector<8x1xf32>
    %cst_7 = arith.constant 2.560000e+02 : f32
    %70 = vector.broadcast %cst_7 : f32 to vector<8x1xf32>
    %71 = arith.divf %69, %70 : vector<8x1xf32>
    %72 = vector.shape_cast %71 : vector<8x1xf32> to vector<8x1xf32>
    %73 = vector.broadcast %72 : vector<8x1xf32> to vector<8x256xf32>
    %74 = vector.extract_strided_slice %59 {offsets = [0, 512], sizes = [8, 256], strides = [1, 1]} : vector<8x1024xf32> to vector<8x256xf32>
    %cst_8 = arith.constant dense<0.000000e+00> : vector<8xf32>
    %75 = vector.multi_reduction <add>, %74, %cst_8 [1] : vector<8x256xf32> to vector<8xf32>
    %76 = vector.shape_cast %75 : vector<8xf32> to vector<8x1xf32>
    %cst_9 = arith.constant 2.560000e+02 : f32
    %77 = vector.broadcast %cst_9 : f32 to vector<8x1xf32>
    %78 = arith.divf %76, %77 : vector<8x1xf32>
    %79 = vector.shape_cast %78 : vector<8x1xf32> to vector<8x1xf32>
    %80 = vector.broadcast %79 : vector<8x1xf32> to vector<8x256xf32>
    %81 = vector.extract_strided_slice %59 {offsets = [0, 768], sizes = [8, 256], strides = [1, 1]} : vector<8x1024xf32> to vector<8x256xf32>
    %cst_10 = arith.constant dense<0.000000e+00> : vector<8xf32>
    %82 = vector.multi_reduction <add>, %81, %cst_10 [1] : vector<8x256xf32> to vector<8xf32>
    %83 = vector.shape_cast %82 : vector<8xf32> to vector<8x1xf32>
    %cst_11 = arith.constant 2.560000e+02 : f32
    %84 = vector.broadcast %cst_11 : f32 to vector<8x1xf32>
    %85 = arith.divf %83, %84 : vector<8x1xf32>
    %86 = vector.shape_cast %85 : vector<8x1xf32> to vector<8x1xf32>
    %87 = vector.broadcast %86 : vector<8x1xf32> to vector<8x256xf32>
    %88 = tpu.concatenate %66, %73, %80, %87 in 1 : vector<8x256xf32>, vector<8x256xf32>, vector<8x256xf32>, vector<8x256xf32> -> vector<8x1024xf32>
    %89 = vector.extract_strided_slice %7 {offsets = [0, 0], sizes = [8, 1], strides = [1, 1]} : vector<8x8xf32> to vector<8x1xf32>
    %90 = vector.extract_strided_slice %88 {offsets = [0, 0], sizes = [1, 1024], strides = [1, 1]} : vector<8x1024xf32> to vector<1x1024xf32>
    %91 = vector.broadcast %89 : vector<8x1xf32> to vector<8x1024xf32>
    %92 = vector.broadcast %90 : vector<1x1024xf32> to vector<8x1024xf32>
    %93 = arith.mulf %91, %92 : vector<8x1024xf32>
    %94 = vector.extract_strided_slice %7 {offsets = [0, 1], sizes = [8, 1], strides = [1, 1]} : vector<8x8xf32> to vector<8x1xf32>
    %95 = vector.extract_strided_slice %88 {offsets = [1, 0], sizes = [1, 1024], strides = [1, 1]} : vector<8x1024xf32> to vector<1x1024xf32>
    %96 = vector.broadcast %94 : vector<8x1xf32> to vector<8x1024xf32>
    %97 = vector.broadcast %95 : vector<1x1024xf32> to vector<8x1024xf32>
    %98 = arith.mulf %96, %97 : vector<8x1024xf32>
    %99 = arith.addf %93, %98 : vector<8x1024xf32>
    %100 = vector.extract_strided_slice %7 {offsets = [0, 2], sizes = [8, 1], strides = [1, 1]} : vector<8x8xf32> to vector<8x1xf32>
    %101 = vector.extract_strided_slice %88 {offsets = [2, 0], sizes = [1, 1024], strides = [1, 1]} : vector<8x1024xf32> to vector<1x1024xf32>
    %102 = vector.broadcast %100 : vector<8x1xf32> to vector<8x1024xf32>
    %103 = vector.broadcast %101 : vector<1x1024xf32> to vector<8x1024xf32>
    %104 = arith.mulf %102, %103 : vector<8x1024xf32>
    %105 = arith.addf %99, %104 : vector<8x1024xf32>
    %106 = vector.extract_strided_slice %7 {offsets = [0, 3], sizes = [8, 1], strides = [1, 1]} : vector<8x8xf32> to vector<8x1xf32>
    %107 = vector.extract_strided_slice %88 {offsets = [3, 0], sizes = [1, 1024], strides = [1, 1]} : vector<8x1024xf32> to vector<1x1024xf32>
    %108 = vector.broadcast %106 : vector<8x1xf32> to vector<8x1024xf32>
    %109 = vector.broadcast %107 : vector<1x1024xf32> to vector<8x1024xf32>
    %110 = arith.mulf %108, %109 : vector<8x1024xf32>
    %111 = arith.addf %105, %110 : vector<8x1024xf32>
    %112 = vector.extract_strided_slice %7 {offsets = [0, 4], sizes = [8, 1], strides = [1, 1]} : vector<8x8xf32> to vector<8x1xf32>
    %113 = vector.extract_strided_slice %88 {offsets = [4, 0], sizes = [1, 1024], strides = [1, 1]} : vector<8x1024xf32> to vector<1x1024xf32>
    %114 = vector.broadcast %112 : vector<8x1xf32> to vector<8x1024xf32>
    %115 = vector.broadcast %113 : vector<1x1024xf32> to vector<8x1024xf32>
    %116 = arith.mulf %114, %115 : vector<8x1024xf32>
    %117 = arith.addf %111, %116 : vector<8x1024xf32>
    %118 = vector.extract_strided_slice %7 {offsets = [0, 5], sizes = [8, 1], strides = [1, 1]} : vector<8x8xf32> to vector<8x1xf32>
    %119 = vector.extract_strided_slice %88 {offsets = [5, 0], sizes = [1, 1024], strides = [1, 1]} : vector<8x1024xf32> to vector<1x1024xf32>
    %120 = vector.broadcast %118 : vector<8x1xf32> to vector<8x1024xf32>
    %121 = vector.broadcast %119 : vector<1x1024xf32> to vector<8x1024xf32>
    %122 = arith.mulf %120, %121 : vector<8x1024xf32>
    %123 = arith.addf %117, %122 : vector<8x1024xf32>
    %124 = vector.extract_strided_slice %7 {offsets = [0, 6], sizes = [8, 1], strides = [1, 1]} : vector<8x8xf32> to vector<8x1xf32>
    %125 = vector.extract_strided_slice %88 {offsets = [6, 0], sizes = [1, 1024], strides = [1, 1]} : vector<8x1024xf32> to vector<1x1024xf32>
    %126 = vector.broadcast %124 : vector<8x1xf32> to vector<8x1024xf32>
    %127 = vector.broadcast %125 : vector<1x1024xf32> to vector<8x1024xf32>
    %128 = arith.mulf %126, %127 : vector<8x1024xf32>
    %129 = arith.addf %123, %128 : vector<8x1024xf32>
    %130 = vector.extract_strided_slice %7 {offsets = [0, 7], sizes = [8, 1], strides = [1, 1]} : vector<8x8xf32> to vector<8x1xf32>
    %131 = vector.extract_strided_slice %88 {offsets = [7, 0], sizes = [1, 1024], strides = [1, 1]} : vector<8x1024xf32> to vector<1x1024xf32>
    %132 = vector.broadcast %130 : vector<8x1xf32> to vector<8x1024xf32>
    %133 = vector.broadcast %131 : vector<1x1024xf32> to vector<8x1024xf32>
    %134 = arith.mulf %132, %133 : vector<8x1024xf32>
    %135 = arith.addf %129, %134 : vector<8x1024xf32>
    %136 = vector.broadcast %8 : vector<8x1xf32> to vector<8x1024xf32>
    %137 = arith.addf %135, %136 : vector<8x1024xf32>
    %138 = vector.extract_strided_slice %9 {offsets = [0, 0], sizes = [8, 1], strides = [1, 1]} : vector<8x8xf32> to vector<8x1xf32>
    %139 = vector.extract_strided_slice %88 {offsets = [0, 0], sizes = [1, 1024], strides = [1, 1]} : vector<8x1024xf32> to vector<1x1024xf32>
    %140 = vector.broadcast %138 : vector<8x1xf32> to vector<8x1024xf32>
    %141 = vector.broadcast %139 : vector<1x1024xf32> to vector<8x1024xf32>
    %142 = arith.mulf %140, %141 : vector<8x1024xf32>
    %143 = vector.extract_strided_slice %9 {offsets = [0, 1], sizes = [8, 1], strides = [1, 1]} : vector<8x8xf32> to vector<8x1xf32>
    %144 = vector.extract_strided_slice %88 {offsets = [1, 0], sizes = [1, 1024], strides = [1, 1]} : vector<8x1024xf32> to vector<1x1024xf32>
    %145 = vector.broadcast %143 : vector<8x1xf32> to vector<8x1024xf32>
    %146 = vector.broadcast %144 : vector<1x1024xf32> to vector<8x1024xf32>
    %147 = arith.mulf %145, %146 : vector<8x1024xf32>
    %148 = arith.addf %142, %147 : vector<8x1024xf32>
    %149 = vector.extract_strided_slice %9 {offsets = [0, 2], sizes = [8, 1], strides = [1, 1]} : vector<8x8xf32> to vector<8x1xf32>
    %150 = vector.extract_strided_slice %88 {offsets = [2, 0], sizes = [1, 1024], strides = [1, 1]} : vector<8x1024xf32> to vector<1x1024xf32>
    %151 = vector.broadcast %149 : vector<8x1xf32> to vector<8x1024xf32>
    %152 = vector.broadcast %150 : vector<1x1024xf32> to vector<8x1024xf32>
    %153 = arith.mulf %151, %152 : vector<8x1024xf32>
    %154 = arith.addf %148, %153 : vector<8x1024xf32>
    %155 = vector.extract_strided_slice %9 {offsets = [0, 3], sizes = [8, 1], strides = [1, 1]} : vector<8x8xf32> to vector<8x1xf32>
    %156 = vector.extract_strided_slice %88 {offsets = [3, 0], sizes = [1, 1024], strides = [1, 1]} : vector<8x1024xf32> to vector<1x1024xf32>
    %157 = vector.broadcast %155 : vector<8x1xf32> to vector<8x1024xf32>
    %158 = vector.broadcast %156 : vector<1x1024xf32> to vector<8x1024xf32>
    %159 = arith.mulf %157, %158 : vector<8x1024xf32>
    %160 = arith.addf %154, %159 : vector<8x1024xf32>
    %161 = vector.extract_strided_slice %9 {offsets = [0, 4], sizes = [8, 1], strides = [1, 1]} : vector<8x8xf32> to vector<8x1xf32>
    %162 = vector.extract_strided_slice %88 {offsets = [4, 0], sizes = [1, 1024], strides = [1, 1]} : vector<8x1024xf32> to vector<1x1024xf32>
    %163 = vector.broadcast %161 : vector<8x1xf32> to vector<8x1024xf32>
    %164 = vector.broadcast %162 : vector<1x1024xf32> to vector<8x1024xf32>
    %165 = arith.mulf %163, %164 : vector<8x1024xf32>
    %166 = arith.addf %160, %165 : vector<8x1024xf32>
    %167 = vector.extract_strided_slice %9 {offsets = [0, 5], sizes = [8, 1], strides = [1, 1]} : vector<8x8xf32> to vector<8x1xf32>
    %168 = vector.extract_strided_slice %88 {offsets = [5, 0], sizes = [1, 1024], strides = [1, 1]} : vector<8x1024xf32> to vector<1x1024xf32>
    %169 = vector.broadcast %167 : vector<8x1xf32> to vector<8x1024xf32>
    %170 = vector.broadcast %168 : vector<1x1024xf32> to vector<8x1024xf32>
    %171 = arith.mulf %169, %170 : vector<8x1024xf32>
    %172 = arith.addf %166, %171 : vector<8x1024xf32>
    %173 = vector.extract_strided_slice %9 {offsets = [0, 6], sizes = [8, 1], strides = [1, 1]} : vector<8x8xf32> to vector<8x1xf32>
    %174 = vector.extract_strided_slice %88 {offsets = [6, 0], sizes = [1, 1024], strides = [1, 1]} : vector<8x1024xf32> to vector<1x1024xf32>
    %175 = vector.broadcast %173 : vector<8x1xf32> to vector<8x1024xf32>
    %176 = vector.broadcast %174 : vector<1x1024xf32> to vector<8x1024xf32>
    %177 = arith.mulf %175, %176 : vector<8x1024xf32>
    %178 = arith.addf %172, %177 : vector<8x1024xf32>
    %179 = vector.extract_strided_slice %9 {offsets = [0, 7], sizes = [8, 1], strides = [1, 1]} : vector<8x8xf32> to vector<8x1xf32>
    %180 = vector.extract_strided_slice %88 {offsets = [7, 0], sizes = [1, 1024], strides = [1, 1]} : vector<8x1024xf32> to vector<1x1024xf32>
    %181 = vector.broadcast %179 : vector<8x1xf32> to vector<8x1024xf32>
    %182 = vector.broadcast %180 : vector<1x1024xf32> to vector<8x1024xf32>
    %183 = arith.mulf %181, %182 : vector<8x1024xf32>
    %184 = arith.addf %178, %183 : vector<8x1024xf32>
    %185 = vector.broadcast %10 : vector<8x1xf32> to vector<8x1024xf32>
    %186 = arith.addf %184, %185 : vector<8x1024xf32>
    %187 = tpu.concatenate %38, %38 in 1 : vector<8x512xf32>, vector<8x512xf32> -> vector<8x1024xf32>
    %cst_12 = arith.constant 1.000000e+00 : f32
    %188 = vector.broadcast %cst_12 : f32 to vector<8x1024xf32>
    %189 = arith.addf %188, %137 : vector<8x1024xf32>
    %190 = arith.mulf %187, %189 : vector<8x1024xf32>
    %191 = arith.addf %190, %186 : vector<8x1024xf32>
    %cst_13 = arith.constant 0.000000e+00 : f32
    %192 = vector.broadcast %cst_13 : f32 to vector<8x1024xf32>
    %193 = arith.maximumf %191, %192 : vector<8x1024xf32>
    %194 = vector.extract_strided_slice %11 {offsets = [0, 0], sizes = [3, 1], strides = [1, 1]} : vector<3x8xf32> to vector<3x1xf32>
    %195 = vector.extract_strided_slice %193 {offsets = [0, 0], sizes = [1, 1024], strides = [1, 1]} : vector<8x1024xf32> to vector<1x1024xf32>
    %196 = vector.broadcast %194 : vector<3x1xf32> to vector<3x1024xf32>
    %197 = vector.broadcast %195 : vector<1x1024xf32> to vector<3x1024xf32>
    %198 = arith.mulf %196, %197 : vector<3x1024xf32>
    %199 = vector.extract_strided_slice %11 {offsets = [0, 1], sizes = [3, 1], strides = [1, 1]} : vector<3x8xf32> to vector<3x1xf32>
    %200 = vector.extract_strided_slice %193 {offsets = [1, 0], sizes = [1, 1024], strides = [1, 1]} : vector<8x1024xf32> to vector<1x1024xf32>
    %201 = vector.broadcast %199 : vector<3x1xf32> to vector<3x1024xf32>
    %202 = vector.broadcast %200 : vector<1x1024xf32> to vector<3x1024xf32>
    %203 = arith.mulf %201, %202 : vector<3x1024xf32>
    %204 = arith.addf %198, %203 : vector<3x1024xf32>
    %205 = vector.extract_strided_slice %11 {offsets = [0, 2], sizes = [3, 1], strides = [1, 1]} : vector<3x8xf32> to vector<3x1xf32>
    %206 = vector.extract_strided_slice %193 {offsets = [2, 0], sizes = [1, 1024], strides = [1, 1]} : vector<8x1024xf32> to vector<1x1024xf32>
    %207 = vector.broadcast %205 : vector<3x1xf32> to vector<3x1024xf32>
    %208 = vector.broadcast %206 : vector<1x1024xf32> to vector<3x1024xf32>
    %209 = arith.mulf %207, %208 : vector<3x1024xf32>
    %210 = arith.addf %204, %209 : vector<3x1024xf32>
    %211 = vector.extract_strided_slice %11 {offsets = [0, 3], sizes = [3, 1], strides = [1, 1]} : vector<3x8xf32> to vector<3x1xf32>
    %212 = vector.extract_strided_slice %193 {offsets = [3, 0], sizes = [1, 1024], strides = [1, 1]} : vector<8x1024xf32> to vector<1x1024xf32>
    %213 = vector.broadcast %211 : vector<3x1xf32> to vector<3x1024xf32>
    %214 = vector.broadcast %212 : vector<1x1024xf32> to vector<3x1024xf32>
    %215 = arith.mulf %213, %214 : vector<3x1024xf32>
    %216 = arith.addf %210, %215 : vector<3x1024xf32>
    %217 = vector.extract_strided_slice %11 {offsets = [0, 4], sizes = [3, 1], strides = [1, 1]} : vector<3x8xf32> to vector<3x1xf32>
    %218 = vector.extract_strided_slice %193 {offsets = [4, 0], sizes = [1, 1024], strides = [1, 1]} : vector<8x1024xf32> to vector<1x1024xf32>
    %219 = vector.broadcast %217 : vector<3x1xf32> to vector<3x1024xf32>
    %220 = vector.broadcast %218 : vector<1x1024xf32> to vector<3x1024xf32>
    %221 = arith.mulf %219, %220 : vector<3x1024xf32>
    %222 = arith.addf %216, %221 : vector<3x1024xf32>
    %223 = vector.extract_strided_slice %11 {offsets = [0, 5], sizes = [3, 1], strides = [1, 1]} : vector<3x8xf32> to vector<3x1xf32>
    %224 = vector.extract_strided_slice %193 {offsets = [5, 0], sizes = [1, 1024], strides = [1, 1]} : vector<8x1024xf32> to vector<1x1024xf32>
    %225 = vector.broadcast %223 : vector<3x1xf32> to vector<3x1024xf32>
    %226 = vector.broadcast %224 : vector<1x1024xf32> to vector<3x1024xf32>
    %227 = arith.mulf %225, %226 : vector<3x1024xf32>
    %228 = arith.addf %222, %227 : vector<3x1024xf32>
    %229 = vector.extract_strided_slice %11 {offsets = [0, 6], sizes = [3, 1], strides = [1, 1]} : vector<3x8xf32> to vector<3x1xf32>
    %230 = vector.extract_strided_slice %193 {offsets = [6, 0], sizes = [1, 1024], strides = [1, 1]} : vector<8x1024xf32> to vector<1x1024xf32>
    %231 = vector.broadcast %229 : vector<3x1xf32> to vector<3x1024xf32>
    %232 = vector.broadcast %230 : vector<1x1024xf32> to vector<3x1024xf32>
    %233 = arith.mulf %231, %232 : vector<3x1024xf32>
    %234 = arith.addf %228, %233 : vector<3x1024xf32>
    %235 = vector.extract_strided_slice %11 {offsets = [0, 7], sizes = [3, 1], strides = [1, 1]} : vector<3x8xf32> to vector<3x1xf32>
    %236 = vector.extract_strided_slice %193 {offsets = [7, 0], sizes = [1, 1024], strides = [1, 1]} : vector<8x1024xf32> to vector<1x1024xf32>
    %237 = vector.broadcast %235 : vector<3x1xf32> to vector<3x1024xf32>
    %238 = vector.broadcast %236 : vector<1x1024xf32> to vector<3x1024xf32>
    %239 = arith.mulf %237, %238 : vector<3x1024xf32>
    %240 = arith.addf %234, %239 : vector<3x1024xf32>
    %241 = vector.broadcast %12 : vector<3x1xf32> to vector<3x1024xf32>
    %242 = arith.addf %240, %241 : vector<3x1024xf32>
    %243 = math.tanh %242 : vector<3x1024xf32>
    %244 = tpu.concatenate %0, %243 in 1 : vector<3x1024xf32>, vector<3x1024xf32> -> vector<3x2048xf32>
    %245 = vector.extract_strided_slice %13 {offsets = [0, 0], sizes = [8, 1], strides = [1, 1]} : vector<8x3xf32> to vector<8x1xf32>
    %246 = vector.extract_strided_slice %244 {offsets = [0, 0], sizes = [1, 2048], strides = [1, 1]} : vector<3x2048xf32> to vector<1x2048xf32>
    %247 = vector.broadcast %245 : vector<8x1xf32> to vector<8x2048xf32>
    %248 = vector.broadcast %246 : vector<1x2048xf32> to vector<8x2048xf32>
    %249 = arith.mulf %247, %248 : vector<8x2048xf32>
    %250 = vector.extract_strided_slice %13 {offsets = [0, 1], sizes = [8, 1], strides = [1, 1]} : vector<8x3xf32> to vector<8x1xf32>
    %251 = vector.extract_strided_slice %244 {offsets = [1, 0], sizes = [1, 2048], strides = [1, 1]} : vector<3x2048xf32> to vector<1x2048xf32>
    %252 = vector.broadcast %250 : vector<8x1xf32> to vector<8x2048xf32>
    %253 = vector.broadcast %251 : vector<1x2048xf32> to vector<8x2048xf32>
    %254 = arith.mulf %252, %253 : vector<8x2048xf32>
    %255 = arith.addf %249, %254 : vector<8x2048xf32>
    %256 = vector.extract_strided_slice %13 {offsets = [0, 2], sizes = [8, 1], strides = [1, 1]} : vector<8x3xf32> to vector<8x1xf32>
    %257 = vector.extract_strided_slice %244 {offsets = [2, 0], sizes = [1, 2048], strides = [1, 1]} : vector<3x2048xf32> to vector<1x2048xf32>
    %258 = vector.broadcast %256 : vector<8x1xf32> to vector<8x2048xf32>
    %259 = vector.broadcast %257 : vector<1x2048xf32> to vector<8x2048xf32>
    %260 = arith.mulf %258, %259 : vector<8x2048xf32>
    %261 = arith.addf %255, %260 : vector<8x2048xf32>
    %262 = vector.broadcast %14 : vector<8x1xf32> to vector<8x2048xf32>
    %263 = arith.addf %261, %262 : vector<8x2048xf32>
    %cst_14 = arith.constant 2.000000e-01 : f32
    %264 = vector.broadcast %cst_14 : f32 to vector<8x2048xf32>
    %265 = arith.mulf %264, %263 : vector<8x2048xf32>
    %266 = arith.maximumf %263, %265 : vector<8x2048xf32>
    %267 = vector.extract_strided_slice %266 {offsets = [0, 0], sizes = [8, 512], strides = [1, 1]} : vector<8x2048xf32> to vector<8x512xf32>
    %268 = vector.extract_strided_slice %266 {offsets = [0, 512], sizes = [8, 512], strides = [1, 1]} : vector<8x2048xf32> to vector<8x512xf32>
    %269 = vector.extract_strided_slice %266 {offsets = [0, 1024], sizes = [8, 1024], strides = [1, 1]} : vector<8x2048xf32> to vector<8x1024xf32>
    %270 = vector.extract_strided_slice %269 {offsets = [0, 0], sizes = [8, 512], strides = [1, 1]} : vector<8x1024xf32> to vector<8x512xf32>
    %271 = vector.extract_strided_slice %269 {offsets = [0, 512], sizes = [8, 512], strides = [1, 1]} : vector<8x1024xf32> to vector<8x512xf32>
    %272 = vector.extract_strided_slice %15 {offsets = [0, 0], sizes = [8, 1], strides = [1, 1]} : vector<8x4xf32> to vector<8x1xf32>
    %273 = vector.extract_strided_slice %17 {offsets = [0, 0], sizes = [1, 4], strides = [1, 1]} : vector<4x4xf32> to vector<1x4xf32>
    %274 = vector.broadcast %272 : vector<8x1xf32> to vector<8x4xf32>
    %275 = vector.broadcast %273 : vector<1x4xf32> to vector<8x4xf32>
    %276 = arith.mulf %274, %275 : vector<8x4xf32>
    %277 = vector.extract_strided_slice %15 {offsets = [0, 1], sizes = [8, 1], strides = [1, 1]} : vector<8x4xf32> to vector<8x1xf32>
    %278 = vector.extract_strided_slice %17 {offsets = [1, 0], sizes = [1, 4], strides = [1, 1]} : vector<4x4xf32> to vector<1x4xf32>
    %279 = vector.broadcast %277 : vector<8x1xf32> to vector<8x4xf32>
    %280 = vector.broadcast %278 : vector<1x4xf32> to vector<8x4xf32>
    %281 = arith.mulf %279, %280 : vector<8x4xf32>
    %282 = arith.addf %276, %281 : vector<8x4xf32>
    %283 = vector.extract_strided_slice %15 {offsets = [0, 2], sizes = [8, 1], strides = [1, 1]} : vector<8x4xf32> to vector<8x1xf32>
    %284 = vector.extract_strided_slice %17 {offsets = [2, 0], sizes = [1, 4], strides = [1, 1]} : vector<4x4xf32> to vector<1x4xf32>
    %285 = vector.broadcast %283 : vector<8x1xf32> to vector<8x4xf32>
    %286 = vector.broadcast %284 : vector<1x4xf32> to vector<8x4xf32>
    %287 = arith.mulf %285, %286 : vector<8x4xf32>
    %288 = arith.addf %282, %287 : vector<8x4xf32>
    %289 = vector.extract_strided_slice %15 {offsets = [0, 3], sizes = [8, 1], strides = [1, 1]} : vector<8x4xf32> to vector<8x1xf32>
    %290 = vector.extract_strided_slice %17 {offsets = [3, 0], sizes = [1, 4], strides = [1, 1]} : vector<4x4xf32> to vector<1x4xf32>
    %291 = vector.broadcast %289 : vector<8x1xf32> to vector<8x4xf32>
    %292 = vector.broadcast %290 : vector<1x4xf32> to vector<8x4xf32>
    %293 = arith.mulf %291, %292 : vector<8x4xf32>
    %294 = arith.addf %288, %293 : vector<8x4xf32>
    %295 = vector.extract_strided_slice %294 {offsets = [0, 0], sizes = [8, 1], strides = [1, 1]} : vector<8x4xf32> to vector<8x1xf32>
    %296 = vector.shape_cast %295 : vector<8x1xf32> to vector<8x1xf32>
    %297 = vector.broadcast %296 : vector<8x1xf32> to vector<8x256xf32>
    %298 = vector.extract_strided_slice %294 {offsets = [0, 1], sizes = [8, 1], strides = [1, 1]} : vector<8x4xf32> to vector<8x1xf32>
    %299 = vector.shape_cast %298 : vector<8x1xf32> to vector<8x1xf32>
    %300 = vector.broadcast %299 : vector<8x1xf32> to vector<8x256xf32>
    %301 = vector.extract_strided_slice %294 {offsets = [0, 2], sizes = [8, 1], strides = [1, 1]} : vector<8x4xf32> to vector<8x1xf32>
    %302 = vector.shape_cast %301 : vector<8x1xf32> to vector<8x1xf32>
    %303 = vector.broadcast %302 : vector<8x1xf32> to vector<8x256xf32>
    %304 = vector.extract_strided_slice %294 {offsets = [0, 3], sizes = [8, 1], strides = [1, 1]} : vector<8x4xf32> to vector<8x1xf32>
    %305 = vector.shape_cast %304 : vector<8x1xf32> to vector<8x1xf32>
    %306 = vector.broadcast %305 : vector<8x1xf32> to vector<8x256xf32>
    %307 = tpu.concatenate %297, %300, %303, %306 in 1 : vector<8x256xf32>, vector<8x256xf32>, vector<8x256xf32>, vector<8x256xf32> -> vector<8x1024xf32>
    %308 = vector.extract_strided_slice %16 {offsets = [0, 0], sizes = [1, 1], strides = [1, 1]} : vector<1x4xf32> to vector<1x1xf32>
    %309 = vector.extract_strided_slice %17 {offsets = [0, 0], sizes = [1, 4], strides = [1, 1]} : vector<4x4xf32> to vector<1x4xf32>
    %310 = vector.broadcast %308 : vector<1x1xf32> to vector<1x4xf32>
    %311 = arith.mulf %310, %309 : vector<1x4xf32>
    %312 = vector.extract_strided_slice %16 {offsets = [0, 1], sizes = [1, 1], strides = [1, 1]} : vector<1x4xf32> to vector<1x1xf32>
    %313 = vector.extract_strided_slice %17 {offsets = [1, 0], sizes = [1, 4], strides = [1, 1]} : vector<4x4xf32> to vector<1x4xf32>
    %314 = vector.broadcast %312 : vector<1x1xf32> to vector<1x4xf32>
    %315 = arith.mulf %314, %313 : vector<1x4xf32>
    %316 = arith.addf %311, %315 : vector<1x4xf32>
    %317 = vector.extract_strided_slice %16 {offsets = [0, 2], sizes = [1, 1], strides = [1, 1]} : vector<1x4xf32> to vector<1x1xf32>
    %318 = vector.extract_strided_slice %17 {offsets = [2, 0], sizes = [1, 4], strides = [1, 1]} : vector<4x4xf32> to vector<1x4xf32>
    %319 = vector.broadcast %317 : vector<1x1xf32> to vector<1x4xf32>
    %320 = arith.mulf %319, %318 : vector<1x4xf32>
    %321 = arith.addf %316, %320 : vector<1x4xf32>
    %322 = vector.extract_strided_slice %16 {offsets = [0, 3], sizes = [1, 1], strides = [1, 1]} : vector<1x4xf32> to vector<1x1xf32>
    %323 = vector.extract_strided_slice %17 {offsets = [3, 0], sizes = [1, 4], strides = [1, 1]} : vector<4x4xf32> to vector<1x4xf32>
    %324 = vector.broadcast %322 : vector<1x1xf32> to vector<1x4xf32>
    %325 = arith.mulf %324, %323 : vector<1x4xf32>
    %326 = arith.addf %321, %325 : vector<1x4xf32>
    %327 = vector.extract_strided_slice %326 {offsets = [0, 0], sizes = [1, 1], strides = [1, 1]} : vector<1x4xf32> to vector<1x1xf32>
    %328 = vector.shape_cast %327 : vector<1x1xf32> to vector<1x1xf32>
    %329 = vector.broadcast %328 : vector<1x1xf32> to vector<1x256xf32>
    %330 = vector.extract_strided_slice %326 {offsets = [0, 1], sizes = [1, 1], strides = [1, 1]} : vector<1x4xf32> to vector<1x1xf32>
    %331 = vector.shape_cast %330 : vector<1x1xf32> to vector<1x1xf32>
    %332 = vector.broadcast %331 : vector<1x1xf32> to vector<1x256xf32>
    %333 = vector.extract_strided_slice %326 {offsets = [0, 2], sizes = [1, 1], strides = [1, 1]} : vector<1x4xf32> to vector<1x1xf32>
    %334 = vector.shape_cast %333 : vector<1x1xf32> to vector<1x1xf32>
    %335 = vector.broadcast %334 : vector<1x1xf32> to vector<1x256xf32>
    %336 = vector.extract_strided_slice %326 {offsets = [0, 3], sizes = [1, 1], strides = [1, 1]} : vector<1x4xf32> to vector<1x1xf32>
    %337 = vector.shape_cast %336 : vector<1x1xf32> to vector<1x1xf32>
    %338 = vector.broadcast %337 : vector<1x1xf32> to vector<1x256xf32>
    %339 = tpu.concatenate %329, %332, %335, %338 in 1 : vector<1x256xf32>, vector<1x256xf32>, vector<1x256xf32>, vector<1x256xf32> -> vector<1x1024xf32>
    %340 = vector.extract_strided_slice %307 {offsets = [0, 0], sizes = [1, 1024], strides = [1, 1]} : vector<8x1024xf32> to vector<1x1024xf32>
    %341 = vector.extract_strided_slice %269 {offsets = [0, 0], sizes = [1, 1024], strides = [1, 1]} : vector<8x1024xf32> to vector<1x1024xf32>
    %342 = arith.mulf %340, %341 : vector<1x1024xf32>
    %343 = vector.extract_strided_slice %307 {offsets = [1, 0], sizes = [1, 1024], strides = [1, 1]} : vector<8x1024xf32> to vector<1x1024xf32>
    %344 = vector.extract_strided_slice %269 {offsets = [1, 0], sizes = [1, 1024], strides = [1, 1]} : vector<8x1024xf32> to vector<1x1024xf32>
    %345 = arith.mulf %343, %344 : vector<1x1024xf32>
    %346 = arith.addf %342, %345 : vector<1x1024xf32>
    %347 = vector.extract_strided_slice %307 {offsets = [2, 0], sizes = [1, 1024], strides = [1, 1]} : vector<8x1024xf32> to vector<1x1024xf32>
    %348 = vector.extract_strided_slice %269 {offsets = [2, 0], sizes = [1, 1024], strides = [1, 1]} : vector<8x1024xf32> to vector<1x1024xf32>
    %349 = arith.mulf %347, %348 : vector<1x1024xf32>
    %350 = arith.addf %346, %349 : vector<1x1024xf32>
    %351 = vector.extract_strided_slice %307 {offsets = [3, 0], sizes = [1, 1024], strides = [1, 1]} : vector<8x1024xf32> to vector<1x1024xf32>
    %352 = vector.extract_strided_slice %269 {offsets = [3, 0], sizes = [1, 1024], strides = [1, 1]} : vector<8x1024xf32> to vector<1x1024xf32>
    %353 = arith.mulf %351, %352 : vector<1x1024xf32>
    %354 = arith.addf %350, %353 : vector<1x1024xf32>
    %355 = vector.extract_strided_slice %307 {offsets = [4, 0], sizes = [1, 1024], strides = [1, 1]} : vector<8x1024xf32> to vector<1x1024xf32>
    %356 = vector.extract_strided_slice %269 {offsets = [4, 0], sizes = [1, 1024], strides = [1, 1]} : vector<8x1024xf32> to vector<1x1024xf32>
    %357 = arith.mulf %355, %356 : vector<1x1024xf32>
    %358 = arith.addf %354, %357 : vector<1x1024xf32>
    %359 = vector.extract_strided_slice %307 {offsets = [5, 0], sizes = [1, 1024], strides = [1, 1]} : vector<8x1024xf32> to vector<1x1024xf32>
    %360 = vector.extract_strided_slice %269 {offsets = [5, 0], sizes = [1, 1024], strides = [1, 1]} : vector<8x1024xf32> to vector<1x1024xf32>
    %361 = arith.mulf %359, %360 : vector<1x1024xf32>
    %362 = arith.addf %358, %361 : vector<1x1024xf32>
    %363 = vector.extract_strided_slice %307 {offsets = [6, 0], sizes = [1, 1024], strides = [1, 1]} : vector<8x1024xf32> to vector<1x1024xf32>
    %364 = vector.extract_strided_slice %269 {offsets = [6, 0], sizes = [1, 1024], strides = [1, 1]} : vector<8x1024xf32> to vector<1x1024xf32>
    %365 = arith.mulf %363, %364 : vector<1x1024xf32>
    %366 = arith.addf %362, %365 : vector<1x1024xf32>
    %367 = vector.extract_strided_slice %307 {offsets = [7, 0], sizes = [1, 1024], strides = [1, 1]} : vector<8x1024xf32> to vector<1x1024xf32>
    %368 = vector.extract_strided_slice %269 {offsets = [7, 0], sizes = [1, 1024], strides = [1, 1]} : vector<8x1024xf32> to vector<1x1024xf32>
    %369 = arith.mulf %367, %368 : vector<1x1024xf32>
    %370 = arith.addf %366, %369 : vector<1x1024xf32>
    %371 = arith.addf %370, %339 : vector<1x1024xf32>
    %372 = vector.shape_cast %371 : vector<1x1024xf32> to vector<1x1x1024xf32>
    %cst_15 = arith.constant dense<0.000000e+00> : vector<1xf32>
    %373 = vector.multi_reduction <add>, %372, %cst_15 [1, 2] : vector<1x1x1024xf32> to vector<1xf32>
    %374 = vector.shape_cast %373 : vector<1xf32> to vector<1x1x1xf32>
    %375 = vector.extract %374[0, 0, 0] : f32 from vector<1x1x1xf32>
    %cst_16 = arith.constant -5.000000e-01 : f32
    %376 = arith.mulf %cst_16, %375 : f32
    %cst_17 = arith.constant 5.120000e+02 : f32
    %377 = arith.divf %376, %cst_17 : f32
    %cst_18 = arith.constant 0.000000e+00 : f32
    %378 = vector.broadcast %cst_18 : f32 to vector<1x1024xf32>
    %379 = arith.cmpf oge, %371, %378 : vector<1x1024xf32>
    %380 = arith.extui %379 : vector<1x1024xi1> to vector<1x1024xi32>
    %381 = arith.sitofp %380 : vector<1x1024xi32> to vector<1x1024xf32>
    %382 = vector.shape_cast %381 : vector<1x1024xf32> to vector<1x1x1024xf32>
    %cst_19 = arith.constant dense<0.000000e+00> : vector<1xf32>
    %383 = vector.multi_reduction <add>, %382, %cst_19 [1, 2] : vector<1x1x1024xf32> to vector<1xf32>
    %384 = vector.shape_cast %383 : vector<1xf32> to vector<1x1x1xf32>
    %385 = vector.extract %384[0, 0, 0] : f32 from vector<1x1x1xf32>
    %cst_20 = arith.constant 5.000000e-01 : f32
    %386 = arith.mulf %cst_20, %385 : f32
    %cst_21 = arith.constant 5.120000e+02 : f32
    %387 = arith.divf %386, %cst_21 : f32
    %388 = vector.extract_strided_slice %243 {offsets = [0, 0], sizes = [3, 512], strides = [1, 1]} : vector<3x1024xf32> to vector<3x512xf32>
    %389 = arith.subf %388, %2 : vector<3x512xf32>
    %390 = math.absf %389 : vector<3x512xf32>
    %391 = vector.shape_cast %390 : vector<3x512xf32> to vector<1x3x512xf32>
    %cst_22 = arith.constant dense<0.000000e+00> : vector<1xf32>
    %392 = vector.multi_reduction <add>, %391, %cst_22 [1, 2] : vector<1x3x512xf32> to vector<1xf32>
    %393 = vector.shape_cast %392 : vector<1xf32> to vector<1x1x1xf32>
    %394 = vector.extract %393[0, 0, 0] : f32 from vector<1x1x1xf32>
    %cst_23 = arith.constant 1.536000e+03 : f32
    %395 = arith.divf %394, %cst_23 : f32
    %396 = arith.subf %270, %267 : vector<8x512xf32>
    %397 = math.absf %396 : vector<8x512xf32>
    %398 = vector.shape_cast %397 : vector<8x512xf32> to vector<1x8x512xf32>
    %cst_24 = arith.constant dense<0.000000e+00> : vector<1xf32>
    %399 = vector.multi_reduction <add>, %398, %cst_24 [1, 2] : vector<1x8x512xf32> to vector<1xf32>
    %400 = vector.shape_cast %399 : vector<1xf32> to vector<1x1x1xf32>
    %401 = vector.extract %400[0, 0, 0] : f32 from vector<1x1x1xf32>
    %cst_25 = arith.constant 4.096000e+03 : f32
    %402 = arith.divf %401, %cst_25 : f32
    %403 = arith.addf %267, %268 : vector<8x512xf32>
    %cst_26 = arith.constant 5.000000e-01 : f32
    %404 = vector.broadcast %cst_26 : f32 to vector<8x512xf32>
    %405 = arith.mulf %404, %403 : vector<8x512xf32>
    %406 = arith.subf %271, %405 : vector<8x512xf32>
    %407 = math.absf %406 : vector<8x512xf32>
    %408 = vector.shape_cast %407 : vector<8x512xf32> to vector<1x8x512xf32>
    %cst_27 = arith.constant dense<0.000000e+00> : vector<1xf32>
    %409 = vector.multi_reduction <add>, %408, %cst_27 [1, 2] : vector<1x8x512xf32> to vector<1xf32>
    %410 = vector.shape_cast %409 : vector<1xf32> to vector<1x1x1xf32>
    %411 = vector.extract %410[0, 0, 0] : f32 from vector<1x1x1xf32>
    %cst_28 = arith.constant 4.096000e+03 : f32
    %412 = arith.divf %411, %cst_28 : f32
    %cst_29 = arith.constant 1.000000e+00 : f32
    %413 = arith.mulf %cst_29, %377 : f32
    %cst_30 = arith.constant 1.000000e-01 : f32
    %414 = arith.mulf %cst_30, %395 : f32
    %415 = arith.addf %413, %414 : f32
    %416 = arith.addf %402, %412 : f32
    %cst_31 = arith.constant 1.000000e+00 : f32
    %417 = arith.mulf %cst_31, %416 : f32
    %418 = arith.addf %415, %417 : f32
    %c0_32 = arith.constant 0 : index
    %c0_33 = arith.constant 0 : index
    %419 = memref.load %arg2[%c0_32, %c0_33] : memref<1x6xf32, #tpu.memory_space<smem>>
    memref.store %418, %arg2[%c0_32, %c0_33] : memref<1x6xf32, #tpu.memory_space<smem>>
    %c0_34 = arith.constant 0 : index
    %c1 = arith.constant 1 : index
    %420 = memref.load %arg2[%c0_34, %c1] : memref<1x6xf32, #tpu.memory_space<smem>>
    memref.store %377, %arg2[%c0_34, %c1] : memref<1x6xf32, #tpu.memory_space<smem>>
    %c0_35 = arith.constant 0 : index
    %c2 = arith.constant 2 : index
    %421 = memref.load %arg2[%c0_35, %c2] : memref<1x6xf32, #tpu.memory_space<smem>>
    memref.store %395, %arg2[%c0_35, %c2] : memref<1x6xf32, #tpu.memory_space<smem>>
    %c0_36 = arith.constant 0 : index
    %c3 = arith.constant 3 : index
    %422 = memref.load %arg2[%c0_36, %c3] : memref<1x6xf32, #tpu.memory_space<smem>>
    memref.store %402, %arg2[%c0_36, %c3] : memref<1x6xf32, #tpu.memory_space<smem>>
    %c0_37 = arith.constant 0 : index
    %c4 = arith.constant 4 : index
    %423 = memref.load %arg2[%c0_37, %c4] : memref<1x6xf32, #tpu.memory_space<smem>>
    memref.store %412, %arg2[%c0_37, %c4] : memref<1x6xf32, #tpu.memory_space<smem>>
    %c0_38 = arith.constant 0 : index
    %c5 = arith.constant 5 : index
    %424 = memref.load %arg2[%c0_38, %c5] : memref<1x6xf32, #tpu.memory_space<smem>>
    memref.store %387, %arg2[%c0_38, %c5] : memref<1x6xf32, #tpu.memory_space<smem>>
    return
  }
}

</mosaic_0001>

<llo_original>
// kernel: tpu_custom_call.1
$region0: #{tpu_custom_call.1}
  #allocation0 [shape = 'u32[]', space=smem, size = 0x4, offset = 0x4, fixed_abs, tag = 'smem constant byte address 0x4 - core index']
  #allocation1 [shape = 'u32[72,128]{1,0:T(1,128)}', space=vmem, size = 0x9000, scoped, tag = 'internal scratch']
  %s0 = inlined_call_operand.hbm [shape: f32[3,1024], index: 0, kind: input, shape index: {}]
  %s1 = inlined_call_operand.hbm [shape: f32[8,128], index: 1, kind: input, shape index: {}]
  %s2 = inlined_call_operand.hbm [shape: f32[1,6], index: 2, kind: output, shape index: {}]
  %s3 = sld [smem:[#allocation0]]
  $region26: #{tpu_custom_call.1} parent=0
    _
  %s5 = ssub.s32 1, %s3
  %s6 = scalar_select 0, %s5, %s3
  $region1: #{tpu_custom_call.1} parent=0
    #allocation2 [shape = 'u8[16384]{0}', space=vmem, size = 0x4000, scoped, tag = 'input window, operand 0, single buffered']
    #allocation3 [shape = 's32[1]{0}', space=sflag, size = 0x4, scoped, tag = 'scoped memory for tpu_custom_call.1']
    #allocation4 [shape = 's32[1]{0}', space=sflag, size = 0x4, scoped, tag = 'scoped memory for tpu_custom_call.1']
    #allocation5 [shape = 'u8[4096]{0}', space=vmem, size = 0x1000, scoped, tag = 'input window, operand 1, single buffered']
    #allocation6 [shape = 's32[1]{0}', space=sflag, size = 0x4, scoped, tag = 'scoped memory for tpu_custom_call.1']
    #allocation7 [shape = 'u8[512]{0}', space=smem, size = 0x200, scoped, tag = 'output window, operand 0, single buffered']
    %7 = vsyncpa [#allocation3], 0
    %8 = vsyncpa [#allocation6], 0
    %9 = vsyncpa [#allocation4], 0
    // Predicated region
    $region2: #{tpu_custom_call.1} parent=1 // pred_check
      _
    $region3: #{tpu_custom_call.1} parent=1 // pred_check_branch
      %11 = sbr.rel (0) target = $region5
    $region4: #{tpu_custom_call.1} parent=1 // pred_region
      %13 = vsyncadd [#allocation3], 0
      %s15 = sshll.u32 %s0, 4
      %s16 = int_to_ptr.hbm [resolvable:$true] %s15
      %s17 = sshll.u32 [#allocation2], 4
      %s18 = int_to_ptr.vmem [resolvable:$true] %s17
      %20 = dma.hbm_to_vmem [thread:$0]  %s16, 512, %s18, [#allocation3]
    $region5: #{tpu_custom_call.1} parent=1 // pred_fallthru
      _
    // Predicated region
    $region6: #{tpu_custom_call.1} parent=1 // pred_check
      _
    $region7: #{tpu_custom_call.1} parent=1 // pred_check_branch
      %22 = sbr.rel (0) target = $region9
    $region8: #{tpu_custom_call.1} parent=1 // pred_region
      %24 = vsyncadd [#allocation6], 0
      %s26 = sshll.u32 %s1, 4
      %s27 = int_to_ptr.hbm [resolvable:$true] %s26
      %s28 = sshll.u32 [#allocation5], 4
      %s29 = int_to_ptr.vmem [resolvable:$true] %s28
      %31 = dma.hbm_to_vmem [thread:$0]  %s27, 128, %s29, [#allocation6]
    $region9: #{tpu_custom_call.1} parent=1 // pred_fallthru
      _
    // Predicated region
    $region10: #{tpu_custom_call.1} parent=1 // pred_check
      _
    $region11: #{tpu_custom_call.1} parent=1 // pred_check_branch
      %33 = sbr.rel (0) target = $region13
    $region12: #{tpu_custom_call.1} parent=1 // pred_region
      %35 = dma.done [#allocation3], 512
    $region13: #{tpu_custom_call.1} parent=1 // pred_fallthru
      _
    // Predicated region
    $region14: #{tpu_custom_call.1} parent=1 // pred_check
      _
    $region15: #{tpu_custom_call.1} parent=1 // pred_check_branch
      %37 = sbr.rel (0) target = $region17
    $region16: #{tpu_custom_call.1} parent=1 // pred_region
      %39 = dma.done [#allocation6], 128
    $region17: #{tpu_custom_call.1} parent=1 // pred_fallthru
      _
    %v40 = vld [vmem:[#allocation2] sm:$0x77]
    %v41 = vld [vmem:[#allocation2 + $0x8] sm:$0x77]
    %v42 = vld [vmem:[#allocation2 + $0x10] sm:$0x77]
    %v43 = vld [vmem:[#allocation2 + $0x18] sm:$0x77]
    %v44 = vld [vmem:[#allocation5] sm:$0xff]
    %46 = vset.pattern.permute.xlu0 0
    %47 = vperm.xlu0 %46, %v44
    %v48 = vpop.permute.xlu0 %47
    %v52 = vperm.slane %v40, 0
    %v53 = vperm.slane %v40, 4
    %v54 = vperm.slane %v41, 0
    %v55 = vperm.slane %v41, 4
    %v60 = vperm.slane %v52, 0
    %v61 = vperm.slane %v53, 0
    %v62 = vperm.slane %v54, 0
    %v63 = vperm.slane %v55, 0
    %v64 = vmul.f32 %v48, %v60
    %v65 = vmul.f32 %v48, %v61
    %v66 = vmul.f32 %v48, %v62
    %v67 = vmul.f32 %v48, %v63
    %68 = vset.pattern.permute.xlu0 1
    %69 = vperm.xlu0 %68, %v44
    %v70 = vpop.permute.xlu0 %69
    %v72 = vperm.slane %v40, 1
    %v73 = vperm.slane %v40, 5
    %v74 = vperm.slane %v41, 1
    %v75 = vperm.slane %v41, 5
    %v80 = vperm.slane %v72, 1
    %v81 = vperm.slane %v73, 1
    %v82 = vperm.slane %v74, 1
    %v83 = vperm.slane %v75, 1
    %v84 = vmul.f32 %v70, %v80
    %v85 = vmul.f32 %v70, %v81
    %v86 = vmul.f32 %v70, %v82
    %v87 = vmul.f32 %v70, %v83
    %v88 = vadd.f32 %v64, %v84
    %v89 = vadd.f32 %v65, %v85
    %v90 = vadd.f32 %v66, %v86
    %v91 = vadd.f32 %v67, %v87
    %92 = vset.pattern.permute.xlu0 2
    %93 = vperm.xlu0 %92, %v44
    %v94 = vpop.permute.xlu0 %93
    %v96 = vperm.slane %v40, 2
    %v97 = vperm.slane %v40, 6
    %v98 = vperm.slane %v41, 2
    %v99 = vperm.slane %v41, 6
    %v104 = vperm.slane %v96, 2
    %v105 = vperm.slane %v97, 2
    %v106 = vperm.slane %v98, 2
    %v107 = vperm.slane %v99, 2
    %v108 = vmul.f32 %v94, %v104
    %v109 = vmul.f32 %v94, %v105
    %v110 = vmul.f32 %v94, %v106
    %v111 = vmul.f32 %v94, %v107
    %v112 = vadd.f32 %v88, %v108
    %v113 = vadd.f32 %v89, %v109
    %v114 = vadd.f32 %v90, %v110
    %v115 = vadd.f32 %v91, %v111
    %116 = vset.pattern.permute.xlu0 3
    %117 = vperm.xlu0 %116, %v44
    %v118 = vpop.permute.xlu0 %117
    %v120 = vadd.f32 %v112, %v118
    %v121 = vadd.f32 %v113, %v118
    %v122 = vadd.f32 %v114, %v118
    %v123 = vadd.f32 %v115, %v118
    %v124 = vmax.f32 %v120, 0.0
    %v125 = vmax.f32 %v121, 0.0
    %v126 = vmax.f32 %v122, 0.0
    %v127 = vmax.f32 %v123, 0.0
    %128 = vset.pattern.permute.xlu0 4
    %129 = vperm.xlu0 %128, %v44
    %v130 = vpop.permute.xlu0 %129
    %v134 = vperm.slane %v42, 0
    %v135 = vperm.slane %v42, 4
    %v136 = vperm.slane %v43, 0
    %v137 = vperm.slane %v43, 4
    %v142 = vperm.slane %v134, 0
    %v143 = vperm.slane %v135, 0
    %v144 = vperm.slane %v136, 0
    %v145 = vperm.slane %v137, 0
    %v146 = vmul.f32 %v130, %v60
    %v147 = vmul.f32 %v130, %v61
    %v148 = vmul.f32 %v130, %v62
    %v149 = vmul.f32 %v130, %v63
    %v150 = vmul.f32 %v130, %v142
    %v151 = vmul.f32 %v130, %v143
    %v152 = vmul.f32 %v130, %v144
    %v153 = vmul.f32 %v130, %v145
    %154 = vset.pattern.permute.xlu0 5
    %155 = vperm.xlu0 %154, %v44
    %v156 = vpop.permute.xlu0 %155
    %v158 = vperm.slane %v42, 1
    %v159 = vperm.slane %v42, 5
    %v160 = vperm.slane %v43, 1
    %v161 = vperm.slane %v43, 5
    %v166 = vperm.slane %v158, 1
    %v167 = vperm.slane %v159, 1
    %v168 = vperm.slane %v160, 1
    %v169 = vperm.slane %v161, 1
    %v170 = vmul.f32 %v156, %v80
    %v171 = vmul.f32 %v156, %v81
    %v172 = vmul.f32 %v156, %v82
    %v173 = vmul.f32 %v156, %v83
    %v174 = vmul.f32 %v156, %v166
    %v175 = vmul.f32 %v156, %v167
    %v176 = vmul.f32 %v156, %v168
    %v177 = vmul.f32 %v156, %v169
    %v178 = vadd.f32 %v146, %v170
    %v179 = vadd.f32 %v147, %v171
    %v180 = vadd.f32 %v148, %v172
    %v181 = vadd.f32 %v149, %v173
    %v182 = vadd.f32 %v150, %v174
    %v183 = vadd.f32 %v151, %v175
    %v184 = vadd.f32 %v152, %v176
    %v185 = vadd.f32 %v153, %v177
    %186 = vset.pattern.permute.xlu0 6
    %187 = vperm.xlu0 %186, %v44
    %v188 = vpop.permute.xlu0 %187
    %v190 = vperm.slane %v42, 2
    %v191 = vperm.slane %v42, 6
    %v192 = vperm.slane %v43, 2
    %v193 = vperm.slane %v43, 6
    %v198 = vperm.slane %v190, 2
    %v199 = vperm.slane %v191, 2
    %v200 = vperm.slane %v192, 2
    %v201 = vperm.slane %v193, 2
    %v202 = vmul.f32 %v188, %v104
    %v203 = vmul.f32 %v188, %v105
    %v204 = vmul.f32 %v188, %v106
    %v205 = vmul.f32 %v188, %v107
    %v206 = vmul.f32 %v188, %v198
    %v207 = vmul.f32 %v188, %v199
    %v208 = vmul.f32 %v188, %v200
    %v209 = vmul.f32 %v188, %v201
    %v210 = vadd.f32 %v178, %v202
    %v211 = vadd.f32 %v179, %v203
    %v212 = vadd.f32 %v180, %v204
    %v213 = vadd.f32 %v181, %v205
    %v214 = vadd.f32 %v182, %v206
    %v215 = vadd.f32 %v183, %v207
    %v216 = vadd.f32 %v184, %v208
    %v217 = vadd.f32 %v185, %v209
    %218 = vset.pattern.permute.xlu0 7
    %219 = vperm.xlu0 %218, %v44
    %v220 = vpop.permute.xlu0 %219
    %v222 = vadd.f32 %v210, %v220
    %v223 = vadd.f32 %v211, %v220
    %v224 = vadd.f32 %v212, %v220
    %v225 = vadd.f32 %v213, %v220
    %v226 = vadd.f32 %v214, %v220
    %v227 = vadd.f32 %v215, %v220
    %v228 = vadd.f32 %v216, %v220
    %v229 = vadd.f32 %v217, %v220
    %v230 = vmax.f32 %v222, 0.0
    %v231 = vmax.f32 %v223, 0.0
    %v232 = vmax.f32 %v224, 0.0
    %v233 = vmax.f32 %v225, 0.0
    %v234 = vmax.f32 %v226, 0.0
    %v235 = vmax.f32 %v227, 0.0
    %v236 = vmax.f32 %v228, 0.0
    %v237 = vmax.f32 %v229, 0.0
    %v238 = vadd.f32 %v230, %v231
    %239 = vadd.xlane.f32.xlu0 %v238
    %v240 = vpop.xlane.xlu0 %239
    %v241 = vrcp.pop 256.0
    %v242 = vmul.f32 256.0, %v241
    %v243 = vsub.f32 1.0, %v242
    %v244 = vmul.f32 %v241, %v243
    %v245 = vadd.f32 %v241, %v244
    %vm246 = vweird.f32 %v241
    %v247 = vsel %vm246, %v241, %v245
    %v248 = vmul.f32 %v240, %v247
    %v249 = vadd.f32 %v232, %v233
    %250 = vadd.xlane.f32.xlu0 %v249
    %v251 = vpop.xlane.xlu0 %250
    %v252 = vmul.f32 %v251, %v247
    %v253 = vadd.f32 %v234, %v235
    %254 = vadd.xlane.f32.xlu0 %v253
    %v255 = vpop.xlane.xlu0 %254
    %v256 = vmul.f32 %v255, %v247
    %v257 = vadd.f32 %v236, %v237
    %258 = vadd.xlane.f32.xlu0 %v257
    %v259 = vpop.xlane.xlu0 %258
    %v260 = vmul.f32 %v259, %v247
    %261 = vset.pattern.permute.xlu0 8
    %262 = vperm.xlu0 %261, %v44
    %v263 = vpop.permute.xlu0 %262
    %v265 = vperm.slane %v248, 0
    %v266 = vperm.slane %v252, 0
    %v267 = vperm.slane %v256, 0
    %v268 = vperm.slane %v260, 0
    %v269 = vmul.f32 %v263, %v265
    %v270 = vmul.f32 %v263, %v266
    %v271 = vmul.f32 %v263, %v267
    %v272 = vmul.f32 %v263, %v268
    %273 = vset.pattern.permute.xlu0 9
    %274 = vperm.xlu0 %273, %v44
    %v275 = vpop.permute.xlu0 %274
    %v277 = vperm.slane %v248, 1
    %v278 = vperm.slane %v252, 1
    %v279 = vperm.slane %v256, 1
    %v280 = vperm.slane %v260, 1
    %v281 = vmul.f32 %v275, %v277
    %v282 = vmul.f32 %v275, %v278
    %v283 = vmul.f32 %v275, %v279
    %v284 = vmul.f32 %v275, %v280
    %v285 = vadd.f32 %v269, %v281
    %v286 = vadd.f32 %v270, %v282
    %v287 = vadd.f32 %v271, %v283
    %v288 = vadd.f32 %v272, %v284
    %289 = vset.pattern.permute.xlu0 10
    %290 = vperm.xlu0 %289, %v44
    %v291 = vpop.permute.xlu0 %290
    %v293 = vperm.slane %v248, 2
    %v294 = vperm.slane %v252, 2
    %v295 = vperm.slane %v256, 2
    %v296 = vperm.slane %v260, 2
    %v297 = vmul.f32 %v291, %v293
    %v298 = vmul.f32 %v291, %v294
    %v299 = vmul.f32 %v291, %v295
    %v300 = vmul.f32 %v291, %v296
    %v301 = vadd.f32 %v285, %v297
    %v302 = vadd.f32 %v286, %v298
    %v303 = vadd.f32 %v287, %v299
    %v304 = vadd.f32 %v288, %v300
    %305 = vset.pattern.permute.xlu0 11
    %306 = vperm.xlu0 %305, %v44
    %v307 = vpop.permute.xlu0 %306
    %v309 = vperm.slane %v248, 3
    %v310 = vperm.slane %v252, 3
    %v311 = vperm.slane %v256, 3
    %v312 = vperm.slane %v260, 3
    %v313 = vmul.f32 %v307, %v309
    %v314 = vmul.f32 %v307, %v310
    %v315 = vmul.f32 %v307, %v311
    %v316 = vmul.f32 %v307, %v312
    %v317 = vadd.f32 %v301, %v313
    %v318 = vadd.f32 %v302, %v314
    %v319 = vadd.f32 %v303, %v315
    %v320 = vadd.f32 %v304, %v316
    %321 = vset.pattern.permute.xlu0 12
    %322 = vperm.xlu0 %321, %v44
    %v323 = vpop.permute.xlu0 %322
    %v325 = vperm.slane %v248, 4
    %v326 = vperm.slane %v252, 4
    %v327 = vperm.slane %v256, 4
    %v328 = vperm.slane %v260, 4
    %v329 = vmul.f32 %v323, %v325
    %v330 = vmul.f32 %v323, %v326
    %v331 = vmul.f32 %v323, %v327
    %v332 = vmul.f32 %v323, %v328
    %v333 = vadd.f32 %v317, %v329
    %v334 = vadd.f32 %v318, %v330
    %v335 = vadd.f32 %v319, %v331
    %v336 = vadd.f32 %v320, %v332
    %337 = vset.pattern.permute.xlu0 13
    %338 = vperm.xlu0 %337, %v44
    %v339 = vpop.permute.xlu0 %338
    %v341 = vperm.slane %v248, 5
    %v342 = vperm.slane %v252, 5
    %v343 = vperm.slane %v256, 5
    %v344 = vperm.slane %v260, 5
    %v345 = vmul.f32 %v339, %v341
    %v346 = vmul.f32 %v339, %v342
    %v347 = vmul.f32 %v339, %v343
    %v348 = vmul.f32 %v339, %v344
    %v349 = vadd.f32 %v333, %v345
    %v350 = vadd.f32 %v334, %v346
    %v351 = vadd.f32 %v335, %v347
    %v352 = vadd.f32 %v336, %v348
    %353 = vset.pattern.permute.xlu0 14
    %354 = vperm.xlu0 %353, %v44
    %v355 = vpop.permute.xlu0 %354
    %v357 = vperm.slane %v248, 6
    %v358 = vperm.slane %v252, 6
    %v359 = vperm.slane %v256, 6
    %v360 = vperm.slane %v260, 6
    %v361 = vmul.f32 %v355, %v357
    %v362 = vmul.f32 %v355, %v358
    %v363 = vmul.f32 %v355, %v359
    %v364 = vmul.f32 %v355, %v360
    %v365 = vadd.f32 %v349, %v361
    %v366 = vadd.f32 %v350, %v362
    %v367 = vadd.f32 %v351, %v363
    %v368 = vadd.f32 %v352, %v364
    %369 = vset.pattern.permute.xlu0 15
    %370 = vperm.xlu0 %369, %v44
    %v371 = vpop.permute.xlu0 %370
    %v373 = vperm.slane %v248, 7
    %v374 = vperm.slane %v252, 7
    %v375 = vperm.slane %v256, 7
    %v376 = vperm.slane %v260, 7
    %v377 = vmul.f32 %v371, %v373
    %v378 = vmul.f32 %v371, %v374
    %v379 = vmul.f32 %v371, %v375
    %v380 = vmul.f32 %v371, %v376
    %v381 = vadd.f32 %v365, %v377
    %v382 = vadd.f32 %v366, %v378
    %v383 = vadd.f32 %v367, %v379
    %v384 = vadd.f32 %v368, %v380
    %385 = vset.pattern.permute.xlu0 16
    %386 = vperm.xlu0 %385, %v44
    %v387 = vpop.permute.xlu0 %386
    %v389 = vadd.f32 %v381, %v387
    %v390 = vadd.f32 %v382, %v387
    %v391 = vadd.f32 %v383, %v387
    %v392 = vadd.f32 %v384, %v387
    %393 = vset.pattern.permute.xlu0 17
    %394 = vperm.xlu0 %393, %v44
    %v395 = vpop.permute.xlu0 %394
    %v397 = vmul.f32 %v395, %v265
    %v398 = vmul.f32 %v395, %v266
    %v399 = vmul.f32 %v395, %v267
    %v400 = vmul.f32 %v395, %v268
    %401 = vset.pattern.permute.xlu0 18
    %402 = vperm.xlu0 %401, %v44
    %v403 = vpop.permute.xlu0 %402
    %v405 = vmul.f32 %v403, %v277
    %v406 = vmul.f32 %v403, %v278
    %v407 = vmul.f32 %v403, %v279
    %v408 = vmul.f32 %v403, %v280
    %v409 = vadd.f32 %v397, %v405
    %v410 = vadd.f32 %v398, %v406
    %v411 = vadd.f32 %v399, %v407
    %v412 = vadd.f32 %v400, %v408
    %413 = vset.pattern.permute.xlu0 19
    %414 = vperm.xlu0 %413, %v44
    %v415 = vpop.permute.xlu0 %414
    %v417 = vmul.f32 %v415, %v293
    %v418 = vmul.f32 %v415, %v294
    %v419 = vmul.f32 %v415, %v295
    %v420 = vmul.f32 %v415, %v296
    %v421 = vadd.f32 %v409, %v417
    %v422 = vadd.f32 %v410, %v418
    %v423 = vadd.f32 %v411, %v419
    %v424 = vadd.f32 %v412, %v420
    %425 = vset.pattern.permute.xlu0 20
    %426 = vperm.xlu0 %425, %v44
    %v427 = vpop.permute.xlu0 %426
    %v429 = vmul.f32 %v427, %v309
    %v430 = vmul.f32 %v427, %v310
    %v431 = vmul.f32 %v427, %v311
    %v432 = vmul.f32 %v427, %v312
    %v433 = vadd.f32 %v421, %v429
    %v434 = vadd.f32 %v422, %v430
    %v435 = vadd.f32 %v423, %v431
    %v436 = vadd.f32 %v424, %v432
    %437 = vset.pattern.permute.xlu0 21
    %438 = vperm.xlu0 %437, %v44
    %v439 = vpop.permute.xlu0 %438
    %v441 = vmul.f32 %v439, %v325
    %v442 = vmul.f32 %v439, %v326
    %v443 = vmul.f32 %v439, %v327
    %v444 = vmul.f32 %v439, %v328
    %v445 = vadd.f32 %v433, %v441
    %v446 = vadd.f32 %v434, %v442
    %v447 = vadd.f32 %v435, %v443
    %v448 = vadd.f32 %v436, %v444
    %449 = vset.pattern.permute.xlu0 22
    %450 = vperm.xlu0 %449, %v44
    %v451 = vpop.permute.xlu0 %450
    %v453 = vmul.f32 %v451, %v341
    %v454 = vmul.f32 %v451, %v342
    %v455 = vmul.f32 %v451, %v343
    %v456 = vmul.f32 %v451, %v344
    %v457 = vadd.f32 %v445, %v453
    %v458 = vadd.f32 %v446, %v454
    %v459 = vadd.f32 %v447, %v455
    %v460 = vadd.f32 %v448, %v456
    %461 = vset.pattern.permute.xlu0 23
    %462 = vperm.xlu0 %461, %v44
    %v463 = vpop.permute.xlu0 %462
    %v465 = vmul.f32 %v463, %v357
    %v466 = vmul.f32 %v463, %v358
    %v467 = vmul.f32 %v463, %v359
    %v468 = vmul.f32 %v463, %v360
    %v469 = vadd.f32 %v457, %v465
    %v470 = vadd.f32 %v458, %v466
    %v471 = vadd.f32 %v459, %v467
    %v472 = vadd.f32 %v460, %v468
    %473 = vset.pattern.permute.xlu0 24
    %474 = vperm.xlu0 %473, %v44
    %v475 = vpop.permute.xlu0 %474
    %v477 = vmul.f32 %v475, %v373
    %v478 = vmul.f32 %v475, %v374
    %v479 = vmul.f32 %v475, %v375
    %v480 = vmul.f32 %v475, %v376
    %v481 = vadd.f32 %v469, %v477
    %v482 = vadd.f32 %v470, %v478
    %v483 = vadd.f32 %v471, %v479
    %v484 = vadd.f32 %v472, %v480
    %485 = vset.pattern.permute.xlu0 25
    %486 = vperm.xlu0 %485, %v44
    %v487 = vpop.permute.xlu0 %486
    %v489 = vadd.f32 %v481, %v487
    %v490 = vadd.f32 %v482, %v487
    %v491 = vadd.f32 %v483, %v487
    %v492 = vadd.f32 %v484, %v487
    %v493 = vadd.f32 %v389, 1.0
    %v494 = vadd.f32 %v390, 1.0
    %v495 = vadd.f32 %v391, 1.0
    %v496 = vadd.f32 %v392, 1.0
    %v497 = vmul.f32 %v124, %v493
    %v498 = vmul.f32 %v125, %v493
    %v499 = vmul.f32 %v126, %v494
    %v500 = vmul.f32 %v127, %v494
    %v501 = vmul.f32 %v124, %v495
    %v502 = vmul.f32 %v125, %v495
    %v503 = vmul.f32 %v126, %v496
    %v504 = vmul.f32 %v127, %v496
    %v505 = vadd.f32 %v497, %v489
    %v506 = vadd.f32 %v498, %v489
    %v507 = vadd.f32 %v499, %v490
    %v508 = vadd.f32 %v500, %v490
    %v509 = vadd.f32 %v501, %v491
    %v510 = vadd.f32 %v502, %v491
    %v511 = vadd.f32 %v503, %v492
    %v512 = vadd.f32 %v504, %v492
    %v513 = vmax.f32 %v505, 0.0
    %v514 = vmax.f32 %v506, 0.0
    %v515 = vmax.f32 %v507, 0.0
    %v516 = vmax.f32 %v508, 0.0
    %v517 = vmax.f32 %v509, 0.0
    %v518 = vmax.f32 %v510, 0.0
    %v519 = vmax.f32 %v511, 0.0
    %v520 = vmax.f32 %v512, 0.0
    %521 = vset.pattern.permute.xlu0 26
    %522 = vperm.xlu0 %521, %v44
    %v523 = vpop.permute.xlu0 %522
    %v525 = vperm.slane %v513, 0
    %v526 = vperm.slane %v514, 0
    %v527 = vperm.slane %v515, 0
    %v528 = vperm.slane %v516, 0
    %v529 = vperm.slane %v517, 0
    %v530 = vperm.slane %v518, 0
    %v531 = vperm.slane %v519, 0
    %v532 = vperm.slane %v520, 0
    %v533 = vmul.f32 %v523, %v525
    %v534 = vmul.f32 %v523, %v526
    %v535 = vmul.f32 %v523, %v527
    %v536 = vmul.f32 %v523, %v528
    %v537 = vmul.f32 %v523, %v529
    %v538 = vmul.f32 %v523, %v530
    %v539 = vmul.f32 %v523, %v531
    %v540 = vmul.f32 %v523, %v532
    %541 = vset.pattern.permute.xlu0 27
    %542 = vperm.xlu0 %541, %v44
    %v543 = vpop.permute.xlu0 %542
    %v545 = vperm.slane %v513, 1
    %v546 = vperm.slane %v514, 1
    %v547 = vperm.slane %v515, 1
    %v548 = vperm.slane %v516, 1
    %v549 = vperm.slane %v517, 1
    %v550 = vperm.slane %v518, 1
    %v551 = vperm.slane %v519, 1
    %v552 = vperm.slane %v520, 1
    %v553 = vmul.f32 %v543, %v545
    %v554 = vmul.f32 %v543, %v546
    %v555 = vmul.f32 %v543, %v547
    %v556 = vmul.f32 %v543, %v548
    %v557 = vmul.f32 %v543, %v549
    %v558 = vmul.f32 %v543, %v550
    %v559 = vmul.f32 %v543, %v551
    %v560 = vmul.f32 %v543, %v552
    %v561 = vadd.f32 %v533, %v553
    %v562 = vadd.f32 %v534, %v554
    %v563 = vadd.f32 %v535, %v555
    %v564 = vadd.f32 %v536, %v556
    %v565 = vadd.f32 %v537, %v557
    %v566 = vadd.f32 %v538, %v558
    %v567 = vadd.f32 %v539, %v559
    %v568 = vadd.f32 %v540, %v560
    %569 = vset.pattern.permute.xlu0 28
    %570 = vperm.xlu0 %569, %v44
    %v571 = vpop.permute.xlu0 %570
    %v573 = vperm.slane %v513, 2
    %v574 = vperm.slane %v514, 2
    %v575 = vperm.slane %v515, 2
    %v576 = vperm.slane %v516, 2
    %v577 = vperm.slane %v517, 2
    %v578 = vperm.slane %v518, 2
    %v579 = vperm.slane %v519, 2
    %v580 = vperm.slane %v520, 2
    %v581 = vmul.f32 %v571, %v573
    %v582 = vmul.f32 %v571, %v574
    %v583 = vmul.f32 %v571, %v575
    %v584 = vmul.f32 %v571, %v576
    %v585 = vmul.f32 %v571, %v577
    %v586 = vmul.f32 %v571, %v578
    %v587 = vmul.f32 %v571, %v579
    %v588 = vmul.f32 %v571, %v580
    %v589 = vadd.f32 %v561, %v581
    %v590 = vadd.f32 %v562, %v582
    %v591 = vadd.f32 %v563, %v583
    %v592 = vadd.f32 %v564, %v584
    %v593 = vadd.f32 %v565, %v585
    %v594 = vadd.f32 %v566, %v586
    %v595 = vadd.f32 %v567, %v587
    %v596 = vadd.f32 %v568, %v588
    %597 = vset.pattern.permute.xlu0 29
    %598 = vperm.xlu0 %597, %v44
    %v599 = vpop.permute.xlu0 %598
    %v601 = vperm.slane %v513, 3
    %v602 = vperm.slane %v514, 3
    %v603 = vperm.slane %v515, 3
    %v604 = vperm.slane %v516, 3
    %v605 = vperm.slane %v517, 3
    %v606 = vperm.slane %v518, 3
    %v607 = vperm.slane %v519, 3
    %v608 = vperm.slane %v520, 3
    %v609 = vmul.f32 %v599, %v601
    %v610 = vmul.f32 %v599, %v602
    %v611 = vmul.f32 %v599, %v603
    %v612 = vmul.f32 %v599, %v604
    %v613 = vmul.f32 %v599, %v605
    %v614 = vmul.f32 %v599, %v606
    %v615 = vmul.f32 %v599, %v607
    %v616 = vmul.f32 %v599, %v608
    %v617 = vadd.f32 %v589, %v609
    %v618 = vadd.f32 %v590, %v610
    %v619 = vadd.f32 %v591, %v611
    %v620 = vadd.f32 %v592, %v612
    %v621 = vadd.f32 %v593, %v613
    %v622 = vadd.f32 %v594, %v614
    %v623 = vadd.f32 %v595, %v615
    %v624 = vadd.f32 %v596, %v616
    %625 = vset.pattern.permute.xlu0 30
    %626 = vperm.xlu0 %625, %v44
    %v627 = vpop.permute.xlu0 %626
    %v629 = vperm.slane %v513, 4
    %v630 = vperm.slane %v514, 4
    %v631 = vperm.slane %v515, 4
    %v632 = vperm.slane %v516, 4
    %v633 = vperm.slane %v517, 4
    %v634 = vperm.slane %v518, 4
    %v635 = vperm.slane %v519, 4
    %v636 = vperm.slane %v520, 4
    %v637 = vmul.f32 %v627, %v629
    %v638 = vmul.f32 %v627, %v630
    %v639 = vmul.f32 %v627, %v631
    %v640 = vmul.f32 %v627, %v632
    %v641 = vmul.f32 %v627, %v633
    %v642 = vmul.f32 %v627, %v634
    %v643 = vmul.f32 %v627, %v635
    %v644 = vmul.f32 %v627, %v636
    %v645 = vadd.f32 %v617, %v637
    %v646 = vadd.f32 %v618, %v638
    %v647 = vadd.f32 %v619, %v639
    %v648 = vadd.f32 %v620, %v640
    %v649 = vadd.f32 %v621, %v641
    %v650 = vadd.f32 %v622, %v642
    %v651 = vadd.f32 %v623, %v643
    %v652 = vadd.f32 %v624, %v644
    %653 = vset.pattern.permute.xlu0 31
    %654 = vperm.xlu0 %653, %v44
    %v655 = vpop.permute.xlu0 %654
    %v657 = vperm.slane %v513, 5
    %v658 = vperm.slane %v514, 5
    %v659 = vperm.slane %v515, 5
    %v660 = vperm.slane %v516, 5
    %v661 = vperm.slane %v517, 5
    %v662 = vperm.slane %v518, 5
    %v663 = vperm.slane %v519, 5
    %v664 = vperm.slane %v520, 5
    %v665 = vmul.f32 %v655, %v657
    %v666 = vmul.f32 %v655, %v658
    %v667 = vmul.f32 %v655, %v659
    %v668 = vmul.f32 %v655, %v660
    %v669 = vmul.f32 %v655, %v661
    %v670 = vmul.f32 %v655, %v662
    %v671 = vmul.f32 %v655, %v663
    %v672 = vmul.f32 %v655, %v664
    %v673 = vadd.f32 %v645, %v665
    %v674 = vadd.f32 %v646, %v666
    %v675 = vadd.f32 %v647, %v667
    %v676 = vadd.f32 %v648, %v668
    %v677 = vadd.f32 %v649, %v669
    %v678 = vadd.f32 %v650, %v670
    %v679 = vadd.f32 %v651, %v671
    %v680 = vadd.f32 %v652, %v672
    %681 = vset.pattern.permute.xlu0 32
    %682 = vperm.xlu0 %681, %v44
    %v683 = vpop.permute.xlu0 %682
    %v685 = vperm.slane %v513, 6
    %v686 = vperm.slane %v514, 6
    %v687 = vperm.slane %v515, 6
    %v688 = vperm.slane %v516, 6
    %v689 = vperm.slane %v517, 6
    %v690 = vperm.slane %v518, 6
    %v691 = vperm.slane %v519, 6
    %v692 = vperm.slane %v520, 6
    %v693 = vmul.f32 %v683, %v685
    %v694 = vmul.f32 %v683, %v686
    %v695 = vmul.f32 %v683, %v687
    %v696 = vmul.f32 %v683, %v688
    %v697 = vmul.f32 %v683, %v689
    %v698 = vmul.f32 %v683, %v690
    %v699 = vmul.f32 %v683, %v691
    %v700 = vmul.f32 %v683, %v692
    %v701 = vadd.f32 %v673, %v693
    %v702 = vadd.f32 %v674, %v694
    %v703 = vadd.f32 %v675, %v695
    %v704 = vadd.f32 %v676, %v696
    %v705 = vadd.f32 %v677, %v697
    %v706 = vadd.f32 %v678, %v698
    %v707 = vadd.f32 %v679, %v699
    %v708 = vadd.f32 %v680, %v700
    %709 = vset.pattern.permute.xlu0 33
    %710 = vperm.xlu0 %709, %v44
    %v711 = vpop.permute.xlu0 %710
    %v713 = vperm.slane %v513, 7
    %v714 = vperm.slane %v514, 7
    %v715 = vperm.slane %v515, 7
    %v716 = vperm.slane %v516, 7
    %v717 = vperm.slane %v517, 7
    %v718 = vperm.slane %v518, 7
    %v719 = vperm.slane %v519, 7
    %v720 = vperm.slane %v520, 7
    %v721 = vmul.f32 %v711, %v713
    %v722 = vmul.f32 %v711, %v714
    %v723 = vmul.f32 %v711, %v715
    %v724 = vmul.f32 %v711, %v716
    %v725 = vmul.f32 %v711, %v717
    %v726 = vmul.f32 %v711, %v718
    %v727 = vmul.f32 %v711, %v719
    %v728 = vmul.f32 %v711, %v720
    %v729 = vadd.f32 %v701, %v721
    %v730 = vadd.f32 %v702, %v722
    %v731 = vadd.f32 %v703, %v723
    %v732 = vadd.f32 %v704, %v724
    %v733 = vadd.f32 %v705, %v725
    %v734 = vadd.f32 %v706, %v726
    %v735 = vadd.f32 %v707, %v727
    %v736 = vadd.f32 %v708, %v728
    %737 = vset.pattern.permute.xlu0 34
    %738 = vperm.xlu0 %737, %v44
    %v739 = vpop.permute.xlu0 %738
    %v741 = vadd.f32 %v729, %v739
    %v742 = vadd.f32 %v730, %v739
    %v743 = vadd.f32 %v731, %v739
    %v744 = vadd.f32 %v732, %v739
    %v745 = vadd.f32 %v733, %v739
    %v746 = vadd.f32 %v734, %v739
    %v747 = vadd.f32 %v735, %v739
    %v748 = vadd.f32 %v736, %v739
    %v749 = vtanh.pop %v741
    %v750 = vtanh.pop %v742
    %v751 = vtanh.pop %v743
    %v752 = vtanh.pop %v744
    %v753 = vtanh.pop %v745
    %v754 = vtanh.pop %v746
    %v755 = vtanh.pop %v747
    %v756 = vtanh.pop %v748
    %757 = vst [vmem:[#allocation1] ss:$2 sm:$0xff] %v40
    %s758 = scalar_lea.vmem [#allocation1], 16
    %759 = vst [vmem:[%s758] ss:$2 sm:$0xff] %v41
    %s760 = scalar_lea.vmem [#allocation1], 32
    %761 = vst [vmem:[%s760] ss:$2 sm:$0xff] %v42
    %s762 = scalar_lea.vmem [#allocation1], 48
    %763 = vst [vmem:[%s762] ss:$2 sm:$0xff] %v43
    %v764 = vld.sshfl [vmem:[#allocation1] sm:$0xff pattern:$0x75316420]
    %v765 = vld.sshfl [vmem:[#allocation1 + $0x8] sm:$0xff pattern:$0x75316420]
    %v766 = vld.sshfl [vmem:[#allocation1 + $0x10] sm:$0xff pattern:$0x75316420]
    %v767 = vld.sshfl [vmem:[#allocation1 + $0x18] sm:$0xff pattern:$0x75316420]
    %v768 = vld.sshfl [vmem:[#allocation1 + $0x20] sm:$0xff pattern:$0x75316420]
    %v769 = vld.sshfl [vmem:[#allocation1 + $0x28] sm:$0xff pattern:$0x75316420]
    %v770 = vld.sshfl [vmem:[#allocation1 + $0x30] sm:$0xff pattern:$0x75316420]
    %v771 = vld.sshfl [vmem:[#allocation1 + $0x38] sm:$0xff pattern:$0x75316420]
    %780 = vset.pattern.permute.xlu0 35
    %781 = vperm.xlu0 %780, %v44
    %v782 = vpop.permute.xlu0 %781
    %v784 = vperm.slane %v764, 0
    %v785 = vperm.slane %v765, 0
    %v786 = vperm.slane %v766, 0
    %v787 = vperm.slane %v767, 0
    %v788 = vperm.slane %v768, 0
    %v789 = vperm.slane %v769, 0
    %v790 = vperm.slane %v770, 0
    %v791 = vperm.slane %v771, 0
    %v792 = vperm.slane %v749, 0
    %v793 = vperm.slane %v750, 0
    %v794 = vperm.slane %v751, 0
    %v795 = vperm.slane %v752, 0
    %v796 = vperm.slane %v753, 0
    %v797 = vperm.slane %v754, 0
    %v798 = vperm.slane %v755, 0
    %v799 = vperm.slane %v756, 0
    %v800 = vmul.f32 %v782, %v784
    %v801 = vmul.f32 %v782, %v785
    %v802 = vmul.f32 %v782, %v786
    %v803 = vmul.f32 %v782, %v787
    %v804 = vmul.f32 %v782, %v788
    %v805 = vmul.f32 %v782, %v789
    %v806 = vmul.f32 %v782, %v790
    %v807 = vmul.f32 %v782, %v791
    %v808 = vmul.f32 %v782, %v792
    %v809 = vmul.f32 %v782, %v793
    %v810 = vmul.f32 %v782, %v794
    %v811 = vmul.f32 %v782, %v795
    %v812 = vmul.f32 %v782, %v796
    %v813 = vmul.f32 %v782, %v797
    %v814 = vmul.f32 %v782, %v798
    %v815 = vmul.f32 %v782, %v799
    %816 = vset.pattern.permute.xlu0 36
    %817 = vperm.xlu0 %816, %v44
    %v818 = vpop.permute.xlu0 %817
    %v820 = vperm.slane %v764, 1
    %v821 = vperm.slane %v765, 1
    %v822 = vperm.slane %v766, 1
    %v823 = vperm.slane %v767, 1
    %v824 = vperm.slane %v768, 1
    %v825 = vperm.slane %v769, 1
    %v826 = vperm.slane %v770, 1
    %v827 = vperm.slane %v771, 1
    %v828 = vperm.slane %v749, 1
    %v829 = vperm.slane %v750, 1
    %v830 = vperm.slane %v751, 1
    %v831 = vperm.slane %v752, 1
    %v832 = vperm.slane %v753, 1
    %v833 = vperm.slane %v754, 1
    %v834 = vperm.slane %v755, 1
    %v835 = vperm.slane %v756, 1
    %v836 = vmul.f32 %v818, %v820
    %v837 = vmul.f32 %v818, %v821
    %v838 = vmul.f32 %v818, %v822
    %v839 = vmul.f32 %v818, %v823
    %v840 = vmul.f32 %v818, %v824
    %v841 = vmul.f32 %v818, %v825
    %v842 = vmul.f32 %v818, %v826
    %v843 = vmul.f32 %v818, %v827
    %v844 = vmul.f32 %v818, %v828
    %v845 = vmul.f32 %v818, %v829
    %v846 = vmul.f32 %v818, %v830
    %v847 = vmul.f32 %v818, %v831
    %v848 = vmul.f32 %v818, %v832
    %v849 = vmul.f32 %v818, %v833
    %v850 = vmul.f32 %v818, %v834
    %v851 = vmul.f32 %v818, %v835
    %v852 = vadd.f32 %v800, %v836
    %v853 = vadd.f32 %v801, %v837
    %v854 = vadd.f32 %v802, %v838
    %v855 = vadd.f32 %v803, %v839
    %v856 = vadd.f32 %v804, %v840
    %v857 = vadd.f32 %v805, %v841
    %v858 = vadd.f32 %v806, %v842
    %v859 = vadd.f32 %v807, %v843
    %v860 = vadd.f32 %v808, %v844
    %v861 = vadd.f32 %v809, %v845
    %v862 = vadd.f32 %v810, %v846
    %v863 = vadd.f32 %v811, %v847
    %v864 = vadd.f32 %v812, %v848
    %v865 = vadd.f32 %v813, %v849
    %v866 = vadd.f32 %v814, %v850
    %v867 = vadd.f32 %v815, %v851
    %868 = vset.pattern.permute.xlu0 37
    %869 = vperm.xlu0 %868, %v44
    %v870 = vpop.permute.xlu0 %869
    %v872 = vperm.slane %v764, 2
    %v873 = vperm.slane %v765, 2
    %v874 = vperm.slane %v766, 2
    %v875 = vperm.slane %v767, 2
    %v876 = vperm.slane %v768, 2
    %v877 = vperm.slane %v769, 2
    %v878 = vperm.slane %v770, 2
    %v879 = vperm.slane %v771, 2
    %v880 = vperm.slane %v749, 2
    %v881 = vperm.slane %v750, 2
    %v882 = vperm.slane %v751, 2
    %v883 = vperm.slane %v752, 2
    %v884 = vperm.slane %v753, 2
    %v885 = vperm.slane %v754, 2
    %v886 = vperm.slane %v755, 2
    %v887 = vperm.slane %v756, 2
    %v888 = vmul.f32 %v870, %v872
    %v889 = vmul.f32 %v870, %v873
    %v890 = vmul.f32 %v870, %v874
    %v891 = vmul.f32 %v870, %v875
    %v892 = vmul.f32 %v870, %v876
    %v893 = vmul.f32 %v870, %v877
    %v894 = vmul.f32 %v870, %v878
    %v895 = vmul.f32 %v870, %v879
    %v896 = vmul.f32 %v870, %v880
    %v897 = vmul.f32 %v870, %v881
    %v898 = vmul.f32 %v870, %v882
    %v899 = vmul.f32 %v870, %v883
    %v900 = vmul.f32 %v870, %v884
    %v901 = vmul.f32 %v870, %v885
    %v902 = vmul.f32 %v870, %v886
    %v903 = vmul.f32 %v870, %v887
    %v904 = vadd.f32 %v852, %v888
    %v905 = vadd.f32 %v853, %v889
    %v906 = vadd.f32 %v854, %v890
    %v907 = vadd.f32 %v855, %v891
    %v908 = vadd.f32 %v856, %v892
    %v909 = vadd.f32 %v857, %v893
    %v910 = vadd.f32 %v858, %v894
    %v911 = vadd.f32 %v859, %v895
    %v912 = vadd.f32 %v860, %v896
    %v913 = vadd.f32 %v861, %v897
    %v914 = vadd.f32 %v862, %v898
    %v915 = vadd.f32 %v863, %v899
    %v916 = vadd.f32 %v864, %v900
    %v917 = vadd.f32 %v865, %v901
    %v918 = vadd.f32 %v866, %v902
    %v919 = vadd.f32 %v867, %v903
    %920 = vset.pattern.permute.xlu0 38
    %921 = vperm.xlu0 %920, %v44
    %v922 = vpop.permute.xlu0 %921
    %v924 = vadd.f32 %v904, %v922
    %v925 = vadd.f32 %v905, %v922
    %v926 = vadd.f32 %v906, %v922
    %v927 = vadd.f32 %v907, %v922
    %v928 = vadd.f32 %v908, %v922
    %v929 = vadd.f32 %v909, %v922
    %v930 = vadd.f32 %v910, %v922
    %v931 = vadd.f32 %v911, %v922
    %v932 = vadd.f32 %v912, %v922
    %v933 = vadd.f32 %v913, %v922
    %v934 = vadd.f32 %v914, %v922
    %v935 = vadd.f32 %v915, %v922
    %v936 = vadd.f32 %v916, %v922
    %v937 = vadd.f32 %v917, %v922
    %v938 = vadd.f32 %v918, %v922
    %v939 = vadd.f32 %v919, %v922
    %v940 = vmul.f32 %v924, 0.2
    %v941 = vmul.f32 %v925, 0.2
    %v942 = vmul.f32 %v926, 0.2
    %v943 = vmul.f32 %v927, 0.2
    %v944 = vmul.f32 %v928, 0.2
    %v945 = vmul.f32 %v929, 0.2
    %v946 = vmul.f32 %v930, 0.2
    %v947 = vmul.f32 %v931, 0.2
    %v948 = vmul.f32 %v932, 0.2
    %v949 = vmul.f32 %v933, 0.2
    %v950 = vmul.f32 %v934, 0.2
    %v951 = vmul.f32 %v935, 0.2
    %v952 = vmul.f32 %v936, 0.2
    %v953 = vmul.f32 %v937, 0.2
    %v954 = vmul.f32 %v938, 0.2
    %v955 = vmul.f32 %v939, 0.2
    %v956 = vmax.f32 %v924, %v940
    %v957 = vmax.f32 %v925, %v941
    %v958 = vmax.f32 %v926, %v942
    %v959 = vmax.f32 %v927, %v943
    %v960 = vmax.f32 %v928, %v944
    %v961 = vmax.f32 %v929, %v945
    %v962 = vmax.f32 %v930, %v946
    %v963 = vmax.f32 %v931, %v947
    %v964 = vmax.f32 %v932, %v948
    %v965 = vmax.f32 %v933, %v949
    %v966 = vmax.f32 %v934, %v950
    %v967 = vmax.f32 %v935, %v951
    %v968 = vmax.f32 %v936, %v952
    %v969 = vmax.f32 %v937, %v953
    %v970 = vmax.f32 %v938, %v954
    %v971 = vmax.f32 %v939, %v955
    %972 = vset.pattern.permute.xlu0 39
    %973 = vperm.xlu0 %972, %v44
    %v974 = vpop.permute.xlu0 %973
    %v976 = vperm.slane %v44, 0
    %v977 = vmul.f32 %v974, %v976
    %978 = vset.pattern.permute.xlu0 40
    %979 = vperm.xlu0 %978, %v44
    %v980 = vpop.permute.xlu0 %979
    %v982 = vperm.slane %v44, 1
    %v983 = vmul.f32 %v980, %v982
    %v984 = vadd.f32 %v977, %v983
    %985 = vset.pattern.permute.xlu0 41
    %986 = vperm.xlu0 %985, %v44
    %v987 = vpop.permute.xlu0 %986
    %v989 = vperm.slane %v44, 2
    %v990 = vmul.f32 %v987, %v989
    %v991 = vadd.f32 %v984, %v990
    %992 = vset.pattern.permute.xlu0 42
    %993 = vperm.xlu0 %992, %v44
    %v994 = vpop.permute.xlu0 %993
    %v996 = vperm.slane %v44, 3
    %v997 = vmul.f32 %v994, %v996
    %v998 = vadd.f32 %v991, %v997
    %1000 = vset.pattern.permute.xlu0 47
    %1001 = vperm.xlu0 %1000, %v998
    %v1002 = vpop.permute.xlu0 %1001
    %1004 = vset.pattern.permute.xlu0 48
    %1005 = vperm.xlu0 %1004, %v998
    %v1006 = vpop.permute.xlu0 %1005
    %1008 = vset.pattern.permute.xlu0 49
    %1009 = vperm.xlu0 %1008, %v998
    %v1010 = vpop.permute.xlu0 %1009
    %1012 = vset.pattern.permute.xlu0 50
    %1013 = vperm.xlu0 %1012, %v998
    %v1014 = vpop.permute.xlu0 %1013
    %1016 = vset.pattern.permute.xlu0 43
    %1017 = vperm.xlu0 %1016, %v44
    %v1018 = vpop.permute.xlu0 %1017
    %v1020 = vmul.f32 %v1018, %v44
    %1021 = vset.pattern.permute.xlu0 44
    %1022 = vperm.xlu0 %1021, %v44
    %v1023 = vpop.permute.xlu0 %1022
    %v1025 = vrot.slane %v44, 1
    %1026 = vrot.lane.b32.xlu0 %v1025, 81
    %v1027 = vpop.permute.xlu0 %1026
    %v1029 = vmul.f32 %v1023, %v1027
    %1031 = vrot.lane.b32.xlu0 %v1029, 47
    %v1032 = vpop.permute.xlu0 %1031
    %v1034 = vadd.f32 %v1020, %v1032
    %1035 = vset.pattern.permute.xlu0 45
    %1036 = vperm.xlu0 %1035, %v44
    %v1037 = vpop.permute.xlu0 %1036
    %v1039 = vrot.slane %v44, 2
    %1040 = vrot.lane.b32.xlu0 %v1039, 81
    %v1041 = vpop.permute.xlu0 %1040
    %v1043 = vmul.f32 %v1037, %v1041
    %1045 = vrot.lane.b32.xlu0 %v1043, 47
    %v1046 = vpop.permute.xlu0 %1045
    %v1048 = vadd.f32 %v1034, %v1046
    %1049 = vset.pattern.permute.xlu0 46
    %1050 = vperm.xlu0 %1049, %v44
    %v1051 = vpop.permute.xlu0 %1050
    %v1053 = vrot.slane %v44, 3
    %1054 = vrot.lane.b32.xlu0 %v1053, 81
    %v1055 = vpop.permute.xlu0 %1054
    %v1057 = vmul.f32 %v1051, %v1055
    %1059 = vrot.lane.b32.xlu0 %v1057, 47
    %v1060 = vpop.permute.xlu0 %1059
    %v1062 = vadd.f32 %v1048, %v1060
    %1064 = vset.pattern.permute.xlu0 47
    %1065 = vperm.xlu0 %1064, %v1062
    %v1066 = vpop.permute.xlu0 %1065
    %1068 = vset.pattern.permute.xlu0 48
    %1069 = vperm.xlu0 %1068, %v1062
    %v1070 = vpop.permute.xlu0 %1069
    %1072 = vset.pattern.permute.xlu0 49
    %1073 = vperm.xlu0 %1072, %v1062
    %v1074 = vpop.permute.xlu0 %1073
    %1076 = vset.pattern.permute.xlu0 50
    %1077 = vperm.xlu0 %1076, %v1062
    %v1078 = vpop.permute.xlu0 %1077
    %v1080 = vmul.f32 %v1002, %v964
    %v1081 = vmul.f32 %v1002, %v965
    %v1082 = vmul.f32 %v1006, %v966
    %v1083 = vmul.f32 %v1006, %v967
    %v1084 = vmul.f32 %v1010, %v968
    %v1085 = vmul.f32 %v1010, %v969
    %v1086 = vmul.f32 %v1014, %v970
    %v1087 = vmul.f32 %v1014, %v971
    %v1096 = vrot.slane %v1080, 1
    %v1097 = vrot.slane %v1081, 1
    %v1098 = vrot.slane %v1082, 1
    %v1099 = vrot.slane %v1083, 1
    %v1100 = vrot.slane %v1084, 1
    %v1101 = vrot.slane %v1085, 1
    %v1102 = vrot.slane %v1086, 1
    %v1103 = vrot.slane %v1087, 1
    %v1112 = vadd.f32 %v1080, %v1096
    %v1113 = vadd.f32 %v1081, %v1097
    %v1114 = vadd.f32 %v1082, %v1098
    %v1115 = vadd.f32 %v1083, %v1099
    %v1116 = vadd.f32 %v1084, %v1100
    %v1117 = vadd.f32 %v1085, %v1101
    %v1118 = vadd.f32 %v1086, %v1102
    %v1119 = vadd.f32 %v1087, %v1103
    %v1120 = vrot.slane %v1080, 2
    %v1121 = vrot.slane %v1081, 2
    %v1122 = vrot.slane %v1082, 2
    %v1123 = vrot.slane %v1083, 2
    %v1124 = vrot.slane %v1084, 2
    %v1125 = vrot.slane %v1085, 2
    %v1126 = vrot.slane %v1086, 2
    %v1127 = vrot.slane %v1087, 2
    %v1136 = vadd.f32 %v1112, %v1120
    %v1137 = vadd.f32 %v1113, %v1121
    %v1138 = vadd.f32 %v1114, %v1122
    %v1139 = vadd.f32 %v1115, %v1123
    %v1140 = vadd.f32 %v1116, %v1124
    %v1141 = vadd.f32 %v1117, %v1125
    %v1142 = vadd.f32 %v1118, %v1126
    %v1143 = vadd.f32 %v1119, %v1127
    %v1144 = vrot.slane %v1080, 3
    %v1145 = vrot.slane %v1081, 3
    %v1146 = vrot.slane %v1082, 3
    %v1147 = vrot.slane %v1083, 3
    %v1148 = vrot.slane %v1084, 3
    %v1149 = vrot.slane %v1085, 3
    %v1150 = vrot.slane %v1086, 3
    %v1151 = vrot.slane %v1087, 3
    %v1160 = vadd.f32 %v1136, %v1144
    %v1161 = vadd.f32 %v1137, %v1145
    %v1162 = vadd.f32 %v1138, %v1146
    %v1163 = vadd.f32 %v1139, %v1147
    %v1164 = vadd.f32 %v1140, %v1148
    %v1165 = vadd.f32 %v1141, %v1149
    %v1166 = vadd.f32 %v1142, %v1150
    %v1167 = vadd.f32 %v1143, %v1151
    %v1168 = vrot.slane %v1080, 4
    %v1169 = vrot.slane %v1081, 4
    %v1170 = vrot.slane %v1082, 4
    %v1171 = vrot.slane %v1083, 4
    %v1172 = vrot.slane %v1084, 4
    %v1173 = vrot.slane %v1085, 4
    %v1174 = vrot.slane %v1086, 4
    %v1175 = vrot.slane %v1087, 4
    %v1184 = vadd.f32 %v1160, %v1168
    %v1185 = vadd.f32 %v1161, %v1169
    %v1186 = vadd.f32 %v1162, %v1170
    %v1187 = vadd.f32 %v1163, %v1171
    %v1188 = vadd.f32 %v1164, %v1172
    %v1189 = vadd.f32 %v1165, %v1173
    %v1190 = vadd.f32 %v1166, %v1174
    %v1191 = vadd.f32 %v1167, %v1175
    %v1192 = vrot.slane %v1080, 5
    %v1193 = vrot.slane %v1081, 5
    %v1194 = vrot.slane %v1082, 5
    %v1195 = vrot.slane %v1083, 5
    %v1196 = vrot.slane %v1084, 5
    %v1197 = vrot.slane %v1085, 5
    %v1198 = vrot.slane %v1086, 5
    %v1199 = vrot.slane %v1087, 5
    %v1208 = vadd.f32 %v1184, %v1192
    %v1209 = vadd.f32 %v1185, %v1193
    %v1210 = vadd.f32 %v1186, %v1194
    %v1211 = vadd.f32 %v1187, %v1195
    %v1212 = vadd.f32 %v1188, %v1196
    %v1213 = vadd.f32 %v1189, %v1197
    %v1214 = vadd.f32 %v1190, %v1198
    %v1215 = vadd.f32 %v1191, %v1199
    %v1216 = vrot.slane %v1080, 6
    %v1217 = vrot.slane %v1081, 6
    %v1218 = vrot.slane %v1082, 6
    %v1219 = vrot.slane %v1083, 6
    %v1220 = vrot.slane %v1084, 6
    %v1221 = vrot.slane %v1085, 6
    %v1222 = vrot.slane %v1086, 6
    %v1223 = vrot.slane %v1087, 6
    %v1232 = vadd.f32 %v1208, %v1216
    %v1233 = vadd.f32 %v1209, %v1217
    %v1234 = vadd.f32 %v1210, %v1218
    %v1235 = vadd.f32 %v1211, %v1219
    %v1236 = vadd.f32 %v1212, %v1220
    %v1237 = vadd.f32 %v1213, %v1221
    %v1238 = vadd.f32 %v1214, %v1222
    %v1239 = vadd.f32 %v1215, %v1223
    %v1240 = vrot.slane %v1080, 7
    %v1241 = vrot.slane %v1081, 7
    %v1242 = vrot.slane %v1082, 7
    %v1243 = vrot.slane %v1083, 7
    %v1244 = vrot.slane %v1084, 7
    %v1245 = vrot.slane %v1085, 7
    %v1246 = vrot.slane %v1086, 7
    %v1247 = vrot.slane %v1087, 7
    %v1256 = vadd.f32 %v1232, %v1240
    %v1257 = vadd.f32 %v1233, %v1241
    %v1258 = vadd.f32 %v1234, %v1242
    %v1259 = vadd.f32 %v1235, %v1243
    %v1260 = vadd.f32 %v1236, %v1244
    %v1261 = vadd.f32 %v1237, %v1245
    %v1262 = vadd.f32 %v1238, %v1246
    %v1263 = vadd.f32 %v1239, %v1247
    %v1264 = vadd.f32 %v1256, %v1066
    %v1265 = vadd.f32 %v1257, %v1066
    %v1266 = vadd.f32 %v1258, %v1070
    %v1267 = vadd.f32 %v1259, %v1070
    %v1268 = vadd.f32 %v1260, %v1074
    %v1269 = vadd.f32 %v1261, %v1074
    %v1270 = vadd.f32 %v1262, %v1078
    %v1271 = vadd.f32 %v1263, %v1078
    %vm1272 = vcmask 1040384
    %v1273 = vsel %vm1272, %v1264, 0.0
    %v1274 = vsel %vm1272, %v1265, 0.0
    %v1275 = vadd.f32 %v1273, %v1274
    %v1276 = vsel %vm1272, %v1266, 0.0
    %v1277 = vadd.f32 %v1275, %v1276
    %v1278 = vsel %vm1272, %v1267, 0.0
    %v1279 = vadd.f32 %v1277, %v1278
    %v1280 = vsel %vm1272, %v1268, 0.0
    %v1281 = vadd.f32 %v1279, %v1280
    %v1282 = vsel %vm1272, %v1269, 0.0
    %v1283 = vadd.f32 %v1281, %v1282
    %v1284 = vsel %vm1272, %v1270, 0.0
    %v1285 = vadd.f32 %v1283, %v1284
    %v1286 = vsel %vm1272, %v1271, 0.0
    %v1287 = vadd.f32 %v1285, %v1286
    %1288 = vadd.xlane.f32.xlu0 %v1287
    %v1289 = vpop.xlane.xlu0 %1288
    %v1290 = vrot.slane %v1289, 4
    %v1291 = vadd.f32 %v1289, %v1290
    %v1292 = vrot.slane %v1291, 2
    %v1293 = vadd.f32 %v1291, %v1292
    %v1294 = vrot.slane %v1293, 1
    %v1295 = vadd.f32 %v1293, %v1294
    %s1296 = vtos %v1295
    %s1297 = smul.f32 %s1296, -0.5
    %v1298 = vrcp.pop 512.0
    %v1299 = vmul.f32 512.0, %v1298
    %v1300 = vsub.f32 1.0, %v1299
    %v1301 = vmul.f32 %v1298, %v1300
    %v1302 = vadd.f32 %v1298, %v1301
    %vm1303 = vweird.f32 %v1298
    %v1304 = vsel %vm1303, %v1298, %v1302
    %s1305 = vtos %v1304
    %s1306 = smul.f32 %s1297, %s1305
    %vm1307 = vcmp.ge.f32.partialorder %v1264, 0.0
    %vm1308 = vcmp.ge.f32.partialorder %v1265, 0.0
    %vm1309 = vcmp.ge.f32.partialorder %v1266, 0.0
    %vm1310 = vcmp.ge.f32.partialorder %v1267, 0.0
    %vm1311 = vcmp.ge.f32.partialorder %v1268, 0.0
    %vm1312 = vcmp.ge.f32.partialorder %v1269, 0.0
    %vm1313 = vcmp.ge.f32.partialorder %v1270, 0.0
    %vm1314 = vcmp.ge.f32.partialorder %v1271, 0.0
    %v1315 = vsel %vm1307, 1, 0
    %v1316 = vsel %vm1308, 1, 0
    %v1317 = vsel %vm1309, 1, 0
    %v1318 = vsel %vm1310, 1, 0
    %v1319 = vsel %vm1311, 1, 0
    %v1320 = vsel %vm1312, 1, 0
    %v1321 = vsel %vm1313, 1, 0
    %v1322 = vsel %vm1314, 1, 0
    %v1323 = vcvt.s32.f32 %v1315
    %v1324 = vcvt.s32.f32 %v1316
    %v1325 = vcvt.s32.f32 %v1317
    %v1326 = vcvt.s32.f32 %v1318
    %v1327 = vcvt.s32.f32 %v1319
    %v1328 = vcvt.s32.f32 %v1320
    %v1329 = vcvt.s32.f32 %v1321
    %v1330 = vcvt.s32.f32 %v1322
    %v1331 = vsel %vm1272, %v1323, 0.0
    %v1332 = vsel %vm1272, %v1324, 0.0
    %v1333 = vadd.f32 %v1331, %v1332
    %v1334 = vsel %vm1272, %v1325, 0.0
    %v1335 = vadd.f32 %v1333, %v1334
    %v1336 = vsel %vm1272, %v1326, 0.0
    %v1337 = vadd.f32 %v1335, %v1336
    %v1338 = vsel %vm1272, %v1327, 0.0
    %v1339 = vadd.f32 %v1337, %v1338
    %v1340 = vsel %vm1272, %v1328, 0.0
    %v1341 = vadd.f32 %v1339, %v1340
    %v1342 = vsel %vm1272, %v1329, 0.0
    %v1343 = vadd.f32 %v1341, %v1342
    %v1344 = vsel %vm1272, %v1330, 0.0
    %v1345 = vadd.f32 %v1343, %v1344
    %1346 = vadd.xlane.f32.xlu0 %v1345
    %v1347 = vpop.xlane.xlu0 %1346
    %v1348 = vrot.slane %v1347, 4
    %v1349 = vadd.f32 %v1347, %v1348
    %v1350 = vrot.slane %v1349, 2
    %v1351 = vadd.f32 %v1349, %v1350
    %v1352 = vrot.slane %v1351, 1
    %v1353 = vadd.f32 %v1351, %v1352
    %s1354 = vtos %v1353
    %s1355 = smul.f32 %s1354, 0.5
    %v1356 = vrcp.pop 512.0
    %v1357 = vmul.f32 512.0, %v1356
    %v1358 = vsub.f32 1.0, %v1357
    %v1359 = vmul.f32 %v1356, %v1358
    %v1360 = vadd.f32 %v1356, %v1359
    %vm1361 = vweird.f32 %v1356
    %v1362 = vsel %vm1361, %v1356, %v1360
    %s1363 = vtos %v1362
    %s1364 = smul.f32 %s1355, %s1363
    %1365 = vst [vmem:[#allocation1] ss:$2 sm:$0xff] %v40
    %s1366 = scalar_lea.vmem [#allocation1], 16
    %1367 = vst [vmem:[%s1366] ss:$2 sm:$0xff] %v41
    %v1368 = vld.sshfl [vmem:[#allocation1] sm:$0xff pattern:$0x75316420]
    %v1369 = vld.sshfl [vmem:[#allocation1 + $0x8] sm:$0xff pattern:$0x75316420]
    %v1370 = vld.sshfl [vmem:[#allocation1 + $0x10] sm:$0xff pattern:$0x75316420]
    %v1371 = vld.sshfl [vmem:[#allocation1 + $0x18] sm:$0xff pattern:$0x75316420]
    %v1376 = vsub.f32 %v749, %v1368
    %v1377 = vsub.f32 %v750, %v1369
    %v1378 = vsub.f32 %v751, %v1370
    %v1379 = vsub.f32 %v752, %v1371
    %v1380 = vand.u32 2147483647, %v1376
    %v1381 = vand.u32 2147483647, %v1377
    %v1382 = vand.u32 2147483647, %v1378
    %v1383 = vand.u32 2147483647, %v1379
    %vm1384 = vcmask 1042432
    %v1385 = vsel %vm1384, %v1380, 0.0
    %v1386 = vsel %vm1384, %v1381, 0.0
    %v1387 = vadd.f32 %v1385, %v1386
    %v1388 = vsel %vm1384, %v1382, 0.0
    %v1389 = vadd.f32 %v1387, %v1388
    %v1390 = vsel %vm1384, %v1383, 0.0
    %v1391 = vadd.f32 %v1389, %v1390
    %1392 = vadd.xlane.f32.xlu0 %v1391
    %v1393 = vpop.xlane.xlu0 %1392
    %v1394 = vrot.slane %v1393, 4
    %v1395 = vadd.f32 %v1393, %v1394
    %v1396 = vrot.slane %v1395, 2
    %v1397 = vadd.f32 %v1395, %v1396
    %v1398 = vrot.slane %v1397, 1
    %v1399 = vadd.f32 %v1397, %v1398
    %s1400 = vtos %v1399
    %v1401 = vrcp.pop 1536.0
    %v1402 = vmul.f32 1536.0, %v1401
    %v1403 = vsub.f32 1.0, %v1402
    %v1404 = vmul.f32 %v1401, %v1403
    %v1405 = vadd.f32 %v1401, %v1404
    %vm1406 = vweird.f32 %v1401
    %v1407 = vsel %vm1406, %v1401, %v1405
    %s1408 = vtos %v1407
    %s1409 = smul.f32 %s1400, %s1408
    %v1410 = vsub.f32 %v964, %v956
    %v1411 = vsub.f32 %v965, %v957
    %v1412 = vsub.f32 %v966, %v958
    %v1413 = vsub.f32 %v967, %v959
    %v1414 = vand.u32 2147483647, %v1410
    %v1415 = vand.u32 2147483647, %v1411
    %v1416 = vand.u32 2147483647, %v1412
    %v1417 = vand.u32 2147483647, %v1413
    %v1418 = vadd.f32 %v1414, %v1415
    %v1419 = vadd.f32 %v1418, %v1416
    %v1420 = vadd.f32 %v1419, %v1417
    %1421 = vadd.xlane.f32.xlu0 %v1420
    %v1422 = vpop.xlane.xlu0 %1421
    %v1423 = vrot.slane %v1422, 4
    %v1424 = vadd.f32 %v1422, %v1423
    %v1425 = vrot.slane %v1424, 2
    %v1426 = vadd.f32 %v1424, %v1425
    %v1427 = vrot.slane %v1426, 1
    %v1428 = vadd.f32 %v1426, %v1427
    %s1429 = vtos %v1428
    %v1430 = vrcp.pop 4096.0
    %v1431 = vmul.f32 4096.0, %v1430
    %v1432 = vsub.f32 1.0, %v1431
    %v1433 = vmul.f32 %v1430, %v1432
    %v1434 = vadd.f32 %v1430, %v1433
    %vm1435 = vweird.f32 %v1430
    %v1436 = vsel %vm1435, %v1430, %v1434
    %s1437 = vtos %v1436
    %s1438 = smul.f32 %s1429, %s1437
    %v1439 = vadd.f32 %v956, %v960
    %v1440 = vadd.f32 %v957, %v961
    %v1441 = vadd.f32 %v958, %v962
    %v1442 = vadd.f32 %v959, %v963
    %v1443 = vmul.f32 %v1439, 0.5
    %v1444 = vmul.f32 %v1440, 0.5
    %v1445 = vmul.f32 %v1441, 0.5
    %v1446 = vmul.f32 %v1442, 0.5
    %v1447 = vsub.f32 %v968, %v1443
    %v1448 = vsub.f32 %v969, %v1444
    %v1449 = vsub.f32 %v970, %v1445
    %v1450 = vsub.f32 %v971, %v1446
    %v1451 = vand.u32 2147483647, %v1447
    %v1452 = vand.u32 2147483647, %v1448
    %v1453 = vand.u32 2147483647, %v1449
    %v1454 = vand.u32 2147483647, %v1450
    %v1455 = vadd.f32 %v1451, %v1452
    %v1456 = vadd.f32 %v1455, %v1453
    %v1457 = vadd.f32 %v1456, %v1454
    %1458 = vadd.xlane.f32.xlu0 %v1457
    %v1459 = vpop.xlane.xlu0 %1458
    %v1460 = vrot.slane %v1459, 4
    %v1461 = vadd.f32 %v1459, %v1460
    %v1462 = vrot.slane %v1461, 2
    %v1463 = vadd.f32 %v1461, %v1462
    %v1464 = vrot.slane %v1463, 1
    %v1465 = vadd.f32 %v1463, %v1464
    %s1466 = vtos %v1465
    %v1467 = vrcp.pop 4096.0
    %v1468 = vmul.f32 4096.0, %v1467
    %v1469 = vsub.f32 1.0, %v1468
    %v1470 = vmul.f32 %v1467, %v1469
    %v1471 = vadd.f32 %v1467, %v1470
    %vm1472 = vweird.f32 %v1467
    %v1473 = vsel %vm1472, %v1467, %v1471
    %s1474 = vtos %v1473
    %s1475 = smul.f32 %s1466, %s1474
    %s1476 = smul.f32 %s1409, 0.1
    %s1477 = sadd.f32 %s1306, %s1476
    %s1478 = sadd.f32 %s1438, %s1475
    %s1479 = sadd.f32 %s1477, %s1478
    %s1480 = scalar_lea.smem [#allocation7], 0
    %1481 = sst [smem:[%s1480]] %s1479
    %s1482 = scalar_lea.smem [#allocation7], 1
    %1483 = sst [smem:[%s1482]] %s1306
    %s1484 = scalar_lea.smem [#allocation7], 2
    %1485 = sst [smem:[%s1484]] %s1409
    %s1486 = scalar_lea.smem [#allocation7], 3
    %1487 = sst [smem:[%s1486]] %s1438
    %s1488 = scalar_lea.smem [#allocation7], 4
    %1489 = sst [smem:[%s1488]] %s1475
    %s1490 = scalar_lea.smem [#allocation7], 5
    %1491 = sst [smem:[%s1490]] %s1364
    // Predicated region
    $region18: #{tpu_custom_call.1} parent=1 // pred_check
      _
    $region19: #{tpu_custom_call.1} parent=1 // pred_check_branch
      %1493 = sbr.rel (0) target = $region21
    $region20: #{tpu_custom_call.1} parent=1 // pred_region
      %1495 = vsyncadd [#allocation4], 0
      %s1497 = sshll.u32 %s2, 4
      %s1498 = int_to_ptr.hbm [resolvable:$true] %s1497
      %1500 = dma.smem_to_hbm [#allocation7], 16, %s1498, [#allocation4]
    $region21: #{tpu_custom_call.1} parent=1 // pred_fallthru
      _
    // Predicated region
    $region22: #{tpu_custom_call.1} parent=1 // pred_check
      _
    $region23: #{tpu_custom_call.1} parent=1 // pred_check_branch
      %1502 = sbr.rel (0) target = $region25
    $region24: #{tpu_custom_call.1} parent=1 // pred_region
      %1504 = dma.done [#allocation4], 16
    $region25: #{tpu_custom_call.1} parent=1 // pred_fallthru
      _
    %1505 = sfence
    %1506 = vsyncpa [#allocation3], 1
    %1507 = vsyncpa [#allocation6], 1
    %1508 = vsyncpa [#allocation4], 1

</llo_original>
